<compile_context>
chip_gen: v6e
topology: v6e:2x2x1
jax: 0.10.0
libtpu: 0.0.40
codegen_flags: <defaults>
</compile_context>

<pallas_src>
import math
from functools import partial

import jax
import jax.numpy as jnp
from jax.experimental import pallas as pl
from jax.experimental.pallas import tpu as pltpu


def _round_up(x, m):
    return ((x + m - 1) // m) * m


def _pick_tile_h(H, W, K, kcin, coutp, in_itemsize, out_itemsize,
                 budget_bytes=12 << 20):
    """Row-tile height: divides H, keeps tile_h*W sublane-aligned, keeps the
    double-buffered (input-with-halo + output) blocks inside a VMEM budget, and
    prefers >= 2 tiles so the spatial grid axis can be sharded across v7x's cores."""
    def block_bytes(th):
        return ((th + K - 1) * W * kcin * in_itemsize
                + th * W * coutp * out_itemsize)

    divisors = [d for d in range(1, H + 1) if H % d == 0]
    cands = [d for d in divisors if (d * W) % 8 == 0 or d == H]

    def fits(th):
        return 2 * block_bytes(th) <= budget_bytes   # x2: double buffering

    multi = [d for d in cands if d < H and fits(d) and d * W >= 128]
    if multi:
        return max(multi)
    fitting = [d for d in cands if fits(d)]
    if fitting:
        return max(fitting)
    return min(cands)


def _modconv_kernel(x_ref, w_ref, db_ref, o_ref, *, K, W, n_rows, coutp,
                    apply_act, act_slope, act_gain):
    """One (sample, row-tile) grid step of the modulated conv.

    x_ref : ((tile_h+K-1)*W, K*Cin)  s-scaled, zero-padded, width-tap-expanded rows
    w_ref : (K, K*Cin, coutp)        shared equal-lr-scaled weight (VMEM resident)
    db_ref: (2, coutp) f32           row 0 = per-sample demod scale d, row 1 = bias
    o_ref : (n_rows, coutp)          n_rows = tile_h*W; coutp lane-dense (mult of 128)
    """
    acc = jnp.zeros((n_rows, coutp), jnp.float32)
    for ki in range(K):                                   # K row-shifted GEMMs
        xs = x_ref[pl.ds(ki * W, n_rows), :]
        acc = acc + jnp.dot(xs, w_ref[ki], preferred_element_type=jnp.float32)
    out = acc * db_ref[0:1, :] + db_ref[1:2, :]           # demodulate + bias (f32)
    if apply_act:                                         # fused LeakyReLU * gain
        out = jnp.where(out >= 0.0, out, act_slope * out) * act_gain
    o_ref[...] = out.astype(o_ref.dtype)


def modulated_conv2d(x_nhwc, latent, weight_oihw, bias_1o11, mlp_w, mlp_b, *,
                     kernel_size, compute_dtype=jnp.float32, out_dtype=jnp.float32,
                     apply_act=False, act_slope=0.2, act_gain=1.0):
    """ModulatedConv2d.forward (padding_type='zero', no up/down-sample), NHWC in/out.

    Optionally fuses the Styled block's LeakyReLU*gain epilogue into the kernel.
    Returns (B, H, W, Cout) in out_dtype.
    """
    B, H, W, Cin = x_nhwc.shape
    Cout = weight_oihw.shape[0]
    K = kernel_size
    pad = K // 2
    demodulate = K != 1
    kcin = K * Cin
    coutp = _round_up(Cout, 128)                           # lane-dense output columns
    cdt = jnp.dtype(compute_dtype)
    odt = jnp.dtype(out_dtype)

    # ---------- glue: EqualLinear style MLP, equal-lr scaling, fold s / d out ----------
    latent_dim = mlp_w.shape[1]
    s = latent @ (mlp_w * math.sqrt(2.0 / latent_dim)).T + mlp_b           # (B, Cin)
    w_scaled = weight_oihw.astype(jnp.float32) * math.sqrt(2.0 / (Cin * K * K))
    if demodulate:
        w2 = jnp.sum(w_scaled * w_scaled, axis=(2, 3))                     # (Cout, Cin)
        d = jax.lax.rsqrt((s * s) @ w2.T + 1e-5)                           # (B, Cout)
    else:
        d = jnp.ones((B, Cout), jnp.float32)
    d_p = jnp.pad(d, ((0, 0), (0, coutp - Cout)))
    bias_p = jnp.pad(bias_1o11.reshape(Cout).astype(jnp.float32), (0, coutp - Cout))
    db = jnp.stack([d_p, jnp.broadcast_to(bias_p, (B, coutp))], axis=1)    # (B, 2, coutp)

    # shared weight: rows ordered (kj, cin) to match the width-tap expansion below
    w_flat = jnp.transpose(w_scaled, (2, 3, 1, 0)).reshape(K, kcin, Cout)
    w_flat = jnp.pad(w_flat, ((0, 0), (0, 0), (0, coutp - Cout))).astype(cdt)

    # ---------- glue: fold s into the input, zero pad, width-tap expand (Kx not K*Kx),
    #            cut into row tiles with a (K-1)-row halo ----------
    tile_h = _pick_tile_h(H, W, K, kcin, coutp, cdt.itemsize, odt.itemsize)
    n_t = H // tile_h
    rh = tile_h + K - 1
    n_rows = tile_h * W

    x_s = (x_nhwc.astype(jnp.float32) * s[:, None, None, :]).astype(cdt)
    x_p = jnp.pad(x_s, ((0, 0), (pad, pad), (pad, pad), (0, 0)))           # ZeroPad2d
    xw = jnp.concatenate([x_p[:, :, kj:kj + W, :] for kj in range(K)], axis=-1)
    tiles = jnp.stack([xw[:, t * tile_h:t * tile_h + rh] for t in range(n_t)], axis=1)
    tiles = tiles.reshape(B, n_t, rh * W, kcin)            # (B, n_t, (tile_h+K-1)*W, K*Cin)

    # ---------- pallas_call ----------
    in_bytes = B * n_t * rh * W * kcin * cdt.itemsize
    out_bytes = B * H * W * coutp * odt.itemsize
    w_bytes = K * kcin * coutp * cdt.itemsize
    db_bytes = B * 2 * coutp * 4
    cost = pl.CostEstimate(flops=2 * B * H * W * K * kcin * coutp,
                           transcendentals=0,
                           bytes_accessed=in_bytes + out_bytes + w_bytes + db_bytes)

    blk_in = rh * W * kcin * cdt.itemsize
    blk_out = n_rows * coutp * odt.itemsize
    vmem_limit = int(2 * (blk_in + blk_out) + w_bytes + 2 * 2 * coutp * 4 + (4 << 20))
    vmem_limit = min(max(vmem_limit, 8 << 20), 64 << 20)

    grid_spec = pltpu.PrefetchScalarGridSpec(
        num_scalar_prefetch=0,
        grid=(B, n_t),
        in_specs=[
            pl.BlockSpec((None, None, rh * W, kcin), lambda b, t: (b, t, 0, 0)),
            pl.BlockSpec((K, kcin, coutp), lambda b, t: (0, 0, 0)),   # resident weight
            pl.BlockSpec((None, 2, coutp), lambda b, t: (b, 0, 0)),   # per-sample d/bias
        ],
        out_specs=pl.BlockSpec((None, n_rows, coutp), lambda b, t: (b, t, 0)),
    )

    out_flat = pl.pallas_call(
        partial(_modconv_kernel, K=K, W=W, n_rows=n_rows, coutp=coutp,
                apply_act=apply_act, act_slope=act_slope, act_gain=act_gain),
        out_shape=jax.ShapeDtypeStruct((B, H * W, coutp), odt),
        grid_spec=grid_spec,
        compiler_params=pltpu.CompilerParams(
            dimension_semantics=("parallel", "parallel"),
            vmem_limit_bytes=vmem_limit),
        cost_estimate=cost,
    )(tiles, w_flat, db)

    return out_flat.reshape(B, H, W, coutp)[..., :Cout]


def styled_f_conv_block(x_nchw, latent, params, compute_dtype=jnp.float32):
    """Styled_F_ConvBlock.forward (modulated_conv=True, padding='zero', actvn='lrelu'):
    conv0(fin->128, K=3) -> LeakyReLU(0.2)*sqrt(2) (fused) -> conv1(128->fout, K=3)."""
    x = jnp.transpose(x_nchw, (0, 2, 3, 1))                                # NCHW -> NHWC
    h = modulated_conv2d(x, latent, params["w0"], params["b0"],
                         params["mlp_w0"], params["mlp_b0"],
                         kernel_size=3, compute_dtype=compute_dtype,
                         out_dtype=compute_dtype,
                         apply_act=True, act_slope=0.2, act_gain=math.sqrt(2.0))
    y = modulated_conv2d(h, latent, params["w1"], params["b1"],
                         params["mlp_w1"], params["mlp_b1"],
                         kernel_size=3, compute_dtype=compute_dtype,
                         out_dtype=jnp.float32, apply_act=False)
    return jnp.transpose(y, (0, 3, 1, 2))                                  # NHWC -> NCHW


# ----------------------------- pure-JAX reference -----------------------------
def _modulated_conv_ref(x_nchw, latent, weight, bias, mlp_w, mlp_b, K):
    B, Cin, H, W = x_nchw.shape
    pad = K // 2
    latent_dim = mlp_w.shape[1]
    s = latent @ (mlp_w * math.sqrt(2.0 / latent_dim)).T + mlp_b
    w = weight * math.sqrt(2.0 / (Cin * K * K))
    wmod = s[:, None, :, None, None] * w[None]
    if K != 1:
        d = jax.lax.rsqrt(jnp.sum(wmod ** 2, axis=(2, 3, 4)) + 1e-5)
        wmod = wmod * d[:, :, None, None, None]
    outs = []
    for b in range(B):  # grouped conv (groups=batch) == per-sample conv
        o = jax.lax.conv_general_dilated(
            x_nchw[b:b + 1], wmod[b], (1, 1), [(pad, pad), (pad, pad)],
            dimension_numbers=("NCHW", "OIHW", "NCHW"),
            precision=jax.lax.Precision.HIGHEST)
        outs.append(o)
    return jnp.concatenate(outs, axis=0) + bias


def styled_f_conv_block_ref(x, latent, p):
    h = _modulated_conv_ref(x, latent, p["w0"], p["b0"], p["mlp_w0"], p["mlp_b0"], 3)
    h = jnp.where(h >= 0.0, h, 0.2 * h) * math.sqrt(2.0)
    return _modulated_conv_ref(h, latent, p["w1"], p["b1"], p["mlp_w1"], p["mlp_b1"], 3)


if __name__ == "__main__":
    # small shapes consistent with the module: fin=4, fout=8, H=W=16, latent_dim=32
    # (conv0's output channels are fixed to 128 by Styled_F_ConvBlock itself).
    B, fin, fout, H, W, LATENT = 2, 4, 8, 16, 16, 32

    key = jax.random.PRNGKey(0)
    k = jax.random.split(key, 6)
    x = jax.random.normal(k[0], (B, fin, H, W), jnp.float32)
    latent = jax.random.normal(k[1], (B, LATENT), jnp.float32)

    # deterministic parameter init mirroring __init__ (weights normal_(), biases zero_())
    params = {
        "w0": jax.random.normal(k[2], (128, fin, 3, 3), jnp.float32),
        "b0": jnp.zeros((1, 128, 1, 1), jnp.float32),
        "mlp_w0": jax.random.normal(k[3], (fin, LATENT), jnp.float32),
        "mlp_b0": jnp.zeros((fin,), jnp.float32),
        "w1": jax.random.normal(k[4], (fout, 128, 3, 3), jnp.float32),
        "b1": jnp.zeros((1, fout, 1, 1), jnp.float32),
        "mlp_w1": jax.random.normal(k[5], (128, LATENT), jnp.float32),
        "mlp_b1": jnp.zeros((128,), jnp.float32),
    }

    ref = jax.block_until_ready(styled_f_conv_block_ref(x, latent, params))
    scale = float(jnp.max(jnp.abs(ref)))

    # high-accuracy path: f32 operands, f32 MXU accumulation
    fwd_f32 = jax.jit(partial(styled_f_conv_block, compute_dtype=jnp.float32))
    out_f32 = jax.block_until_ready(fwd_f32(x, latent, params))
    assert out_f32.shape == (B, fout, H, W)
    err_f32 = float(jnp.max(jnp.abs(out_f32 - ref)))
    assert err_f32 <= 1e-3 * max(scale, 1.0), f"f32 max err {err_f32} (scale {scale})"

    # fast path: bf16 operands / bf16 intermediate activation, f32 accumulation.
    # Two stacked bf16 convs -> looser (still scale-relative) tolerance.
    fwd_bf16 = jax.jit(partial(styled_f_conv_block, compute_dtype=jnp.bfloat16))
    out_bf16 = jax.block_until_ready(fwd_bf16(x, latent, params))
    assert out_bf16.shape == (B, fout, H, W)
    err_bf16 = float(jnp.max(jnp.abs(out_bf16 - ref)))
    assert err_bf16 <= 1e-1 * max(scale, 1.0), f"bf16 max err {err_bf16} (scale {scale})"

    print("KERNEL_OK")
</pallas_src>

<mosaic_0001>
module attributes {stable_mosaic.version = 11 : i64} {
  func.func @_modconv_kernel(%arg0: i32, %arg1: i32, %arg2: memref<1x1x160x12xf32, #tpu.memory_space<vmem>>, %arg3: memref<3x12x128xf32, #tpu.memory_space<vmem>>, %arg4: memref<1x2x128xf32, #tpu.memory_space<vmem>>, %arg5: memref<1x128x128xf32, #tpu.memory_space<vmem>>) attributes {dimension_semantics = [#tpu.dimension_semantics<parallel>, #tpu.dimension_semantics<parallel>], iteration_bounds = array<i64: 2, 2>, scalar_prefetch = 0 : i64, scratch_operands = 0 : i64, tpu.core_type = #tpu.core_type<tc>, window_params = [{transform_indices = @transform_0, window_bounds = array<i64: 1, 1, 160, 12>}, {pipeline_mode = #tpu.pipeline_mode<synchronous>, transform_indices = @transform_1, window_bounds = array<i64: 3, 12, 128>}, {transform_indices = @transform_2, window_bounds = array<i64: 1, 2, 128>}, {transform_indices = @transform_3, window_bounds = array<i64: 1, 128, 128>}]} {
    %cst = arith.constant 0.000000e+00 : f32
    %0 = vector.broadcast %cst : f32 to vector<128x128xf32>
    %c0 = arith.constant 0 : index
    %c0_0 = arith.constant 0 : index
    %c0_1 = arith.constant 0 : index
    %c0_2 = arith.constant 0 : index
    %1 = vector.load %arg2[%c0, %c0_0, %c0_1, %c0_2] : memref<1x1x160x12xf32, #tpu.memory_space<vmem>>, vector<1x1x128x12xf32>
    %2 = vector.shape_cast %1 : vector<1x1x128x12xf32> to vector<128x12xf32>
    %c0_3 = arith.constant 0 : index
    %c0_4 = arith.constant 0 : index
    %c0_5 = arith.constant 0 : index
    %3 = vector.load %arg3[%c0_3, %c0_4, %c0_5] : memref<3x12x128xf32, #tpu.memory_space<vmem>>, vector<1x12x128xf32>
    %4 = vector.shape_cast %3 : vector<1x12x128xf32> to vector<12x128xf32>
    %cst_6 = arith.constant dense<0.000000e+00> : vector<128x128xf32>
    %5 = tpu.matmul %2, %4, %cst_6 {dimension_numbers = #tpu.dot_dimension_numbers<[1], [0], [0], [1], [0, 0, 1, 1], [], []>} : vector<128x12xf32>, vector<12x128xf32>, vector<128x128xf32> -> vector<128x128xf32>
    %6 = arith.addf %0, %5 : vector<128x128xf32>
    %c0_7 = arith.constant 0 : index
    %c0_8 = arith.constant 0 : index
    %c16 = arith.constant 16 : index
    %c0_9 = arith.constant 0 : index
    %7 = vector.load %arg2[%c0_7, %c0_8, %c16, %c0_9] : memref<1x1x160x12xf32, #tpu.memory_space<vmem>>, vector<1x1x128x12xf32>
    %8 = vector.shape_cast %7 : vector<1x1x128x12xf32> to vector<128x12xf32>
    %c1 = arith.constant 1 : index
    %c0_10 = arith.constant 0 : index
    %c0_11 = arith.constant 0 : index
    %9 = vector.load %arg3[%c1, %c0_10, %c0_11] : memref<3x12x128xf32, #tpu.memory_space<vmem>>, vector<1x12x128xf32>
    %10 = vector.shape_cast %9 : vector<1x12x128xf32> to vector<12x128xf32>
    %cst_12 = arith.constant dense<0.000000e+00> : vector<128x128xf32>
    %11 = tpu.matmul %8, %10, %cst_12 {dimension_numbers = #tpu.dot_dimension_numbers<[1], [0], [0], [1], [0, 0, 1, 1], [], []>} : vector<128x12xf32>, vector<12x128xf32>, vector<128x128xf32> -> vector<128x128xf32>
    %12 = arith.addf %6, %11 : vector<128x128xf32>
    %c0_13 = arith.constant 0 : index
    %c0_14 = arith.constant 0 : index
    %c32 = arith.constant 32 : index
    %c0_15 = arith.constant 0 : index
    %13 = vector.load %arg2[%c0_13, %c0_14, %c32, %c0_15] : memref<1x1x160x12xf32, #tpu.memory_space<vmem>>, vector<1x1x128x12xf32>
    %14 = vector.shape_cast %13 : vector<1x1x128x12xf32> to vector<128x12xf32>
    %c2 = arith.constant 2 : index
    %c0_16 = arith.constant 0 : index
    %c0_17 = arith.constant 0 : index
    %15 = vector.load %arg3[%c2, %c0_16, %c0_17] : memref<3x12x128xf32, #tpu.memory_space<vmem>>, vector<1x12x128xf32>
    %16 = vector.shape_cast %15 : vector<1x12x128xf32> to vector<12x128xf32>
    %cst_18 = arith.constant dense<0.000000e+00> : vector<128x128xf32>
    %17 = tpu.matmul %14, %16, %cst_18 {dimension_numbers = #tpu.dot_dimension_numbers<[1], [0], [0], [1], [0, 0, 1, 1], [], []>} : vector<128x12xf32>, vector<12x128xf32>, vector<128x128xf32> -> vector<128x128xf32>
    %18 = arith.addf %12, %17 : vector<128x128xf32>
    %c0_19 = arith.constant 0 : index
    %c0_20 = arith.constant 0 : index
    %c0_21 = arith.constant 0 : index
    %19 = vector.load %arg4[%c0_19, %c0_20, %c0_21] : memref<1x2x128xf32, #tpu.memory_space<vmem>>, vector<1x1x128xf32>
    %20 = vector.shape_cast %19 : vector<1x1x128xf32> to vector<1x128xf32>
    %21 = vector.broadcast %20 : vector<1x128xf32> to vector<128x128xf32>
    %22 = arith.mulf %18, %21 : vector<128x128xf32>
    %c0_22 = arith.constant 0 : index
    %c1_23 = arith.constant 1 : index
    %c0_24 = arith.constant 0 : index
    %23 = vector.load %arg4[%c0_22, %c1_23, %c0_24] : memref<1x2x128xf32, #tpu.memory_space<vmem>>, vector<1x1x128xf32>
    %24 = vector.shape_cast %23 : vector<1x1x128xf32> to vector<1x128xf32>
    %25 = vector.broadcast %24 : vector<1x128xf32> to vector<128x128xf32>
    %26 = arith.addf %22, %25 : vector<128x128xf32>
    %cst_25 = arith.constant 0.000000e+00 : f32
    %27 = vector.broadcast %cst_25 : f32 to vector<128x128xf32>
    %28 = arith.cmpf oge, %26, %27 : vector<128x128xf32>
    %cst_26 = arith.constant 2.000000e-01 : f32
    %29 = vector.broadcast %cst_26 : f32 to vector<128x128xf32>
    %30 = arith.mulf %29, %26 : vector<128x128xf32>
    %31 = arith.select %28, %26, %30 : vector<128x128xi1>, vector<128x128xf32>
    %cst_27 = arith.constant 1.41421354 : f32
    %32 = vector.broadcast %cst_27 : f32 to vector<128x128xf32>
    %33 = arith.mulf %31, %32 : vector<128x128xf32>
    %c0_28 = arith.constant 0 : index
    %c0_29 = arith.constant 0 : index
    %c0_30 = arith.constant 0 : index
    %34 = vector.load %arg5[%c0_28, %c0_29, %c0_30] : memref<1x128x128xf32, #tpu.memory_space<vmem>>, vector<1x128x128xf32>
    %35 = vector.shape_cast %34 : vector<1x128x128xf32> to vector<128x128xf32>
    %36 = vector.shape_cast %33 : vector<128x128xf32> to vector<1x128x128xf32>
    tpu.vector_store %arg5[%c0_28, %c0_29, %c0_30], %36 {strides = array<i32>} : memref<1x128x128xf32, #tpu.memory_space<vmem>>, vector<1x128x128xf32>,
    return
  }
  func.func @transform_0(%arg0: i32, %arg1: i32) -> (i32, i32, i32, i32) {
    %c0_i32 = arith.constant 0 : i32
    %c0_i32_0 = arith.constant 0 : i32
    %c0_i32_1 = arith.constant 0 : i32
    return %arg0, %arg1, %c0_i32, %c0_i32_0 : i32, i32, i32, i32
  }
  func.func @transform_1(%arg0: i32, %arg1: i32) -> (i32, i32, i32) {
    %c0_i32 = arith.constant 0 : i32
    %c0_i32_0 = arith.constant 0 : i32
    %c0_i32_1 = arith.constant 0 : i32
    %c0_i32_2 = arith.constant 0 : i32
    return %c0_i32, %c0_i32_0, %c0_i32_1 : i32, i32, i32
  }
  func.func @transform_2(%arg0: i32, %arg1: i32) -> (i32, i32, i32) {
    %c0_i32 = arith.constant 0 : i32
    %c0_i32_0 = arith.constant 0 : i32
    %c0_i32_1 = arith.constant 0 : i32
    return %arg0, %c0_i32, %c0_i32_0 : i32, i32, i32
  }
  func.func @transform_3(%arg0: i32, %arg1: i32) -> (i32, i32, i32) {
    %c0_i32 = arith.constant 0 : i32
    %c0_i32_0 = arith.constant 0 : i32
    return %arg0, %arg1, %c0_i32 : i32, i32, i32
  }
}

module attributes {stable_mosaic.version = 11 : i64} {
  func.func @_modconv_kernel(%arg0: i32, %arg1: i32, %arg2: memref<1x1x160x384xf32, #tpu.memory_space<vmem>>, %arg3: memref<3x384x128xf32, #tpu.memory_space<vmem>>, %arg4: memref<1x2x128xf32, #tpu.memory_space<vmem>>, %arg5: memref<1x128x128xf32, #tpu.memory_space<vmem>>) attributes {dimension_semantics = [#tpu.dimension_semantics<parallel>, #tpu.dimension_semantics<parallel>], iteration_bounds = array<i64: 2, 2>, scalar_prefetch = 0 : i64, scratch_operands = 0 : i64, tpu.core_type = #tpu.core_type<tc>, window_params = [{transform_indices = @transform_0, window_bounds = array<i64: 1, 1, 160, 384>}, {pipeline_mode = #tpu.pipeline_mode<synchronous>, transform_indices = @transform_1, window_bounds = array<i64: 3, 384, 128>}, {transform_indices = @transform_2, window_bounds = array<i64: 1, 2, 128>}, {transform_indices = @transform_3, window_bounds = array<i64: 1, 128, 128>}]} {
    %cst = arith.constant 0.000000e+00 : f32
    %0 = vector.broadcast %cst : f32 to vector<128x128xf32>
    %c0 = arith.constant 0 : index
    %c0_0 = arith.constant 0 : index
    %c0_1 = arith.constant 0 : index
    %c0_2 = arith.constant 0 : index
    %1 = vector.load %arg2[%c0, %c0_0, %c0_1, %c0_2] : memref<1x1x160x384xf32, #tpu.memory_space<vmem>>, vector<1x1x128x384xf32>
    %2 = vector.shape_cast %1 : vector<1x1x128x384xf32> to vector<128x384xf32>
    %c0_3 = arith.constant 0 : index
    %c0_4 = arith.constant 0 : index
    %c0_5 = arith.constant 0 : index
    %3 = vector.load %arg3[%c0_3, %c0_4, %c0_5] : memref<3x384x128xf32, #tpu.memory_space<vmem>>, vector<1x384x128xf32>
    %4 = vector.shape_cast %3 : vector<1x384x128xf32> to vector<384x128xf32>
    %cst_6 = arith.constant dense<0.000000e+00> : vector<128x128xf32>
    %5 = tpu.matmul %2, %4, %cst_6 {dimension_numbers = #tpu.dot_dimension_numbers<[1], [0], [0], [1], [0, 0, 1, 1], [], []>} : vector<128x384xf32>, vector<384x128xf32>, vector<128x128xf32> -> vector<128x128xf32>
    %6 = arith.addf %0, %5 : vector<128x128xf32>
    %c0_7 = arith.constant 0 : index
    %c0_8 = arith.constant 0 : index
    %c16 = arith.constant 16 : index
    %c0_9 = arith.constant 0 : index
    %7 = vector.load %arg2[%c0_7, %c0_8, %c16, %c0_9] : memref<1x1x160x384xf32, #tpu.memory_space<vmem>>, vector<1x1x128x384xf32>
    %8 = vector.shape_cast %7 : vector<1x1x128x384xf32> to vector<128x384xf32>
    %c1 = arith.constant 1 : index
    %c0_10 = arith.constant 0 : index
    %c0_11 = arith.constant 0 : index
    %9 = vector.load %arg3[%c1, %c0_10, %c0_11] : memref<3x384x128xf32, #tpu.memory_space<vmem>>, vector<1x384x128xf32>
    %10 = vector.shape_cast %9 : vector<1x384x128xf32> to vector<384x128xf32>
    %cst_12 = arith.constant dense<0.000000e+00> : vector<128x128xf32>
    %11 = tpu.matmul %8, %10, %cst_12 {dimension_numbers = #tpu.dot_dimension_numbers<[1], [0], [0], [1], [0, 0, 1, 1], [], []>} : vector<128x384xf32>, vector<384x128xf32>, vector<128x128xf32> -> vector<128x128xf32>
    %12 = arith.addf %6, %11 : vector<128x128xf32>
    %c0_13 = arith.constant 0 : index
    %c0_14 = arith.constant 0 : index
    %c32 = arith.constant 32 : index
    %c0_15 = arith.constant 0 : index
    %13 = vector.load %arg2[%c0_13, %c0_14, %c32, %c0_15] : memref<1x1x160x384xf32, #tpu.memory_space<vmem>>, vector<1x1x128x384xf32>
    %14 = vector.shape_cast %13 : vector<1x1x128x384xf32> to vector<128x384xf32>
    %c2 = arith.constant 2 : index
    %c0_16 = arith.constant 0 : index
    %c0_17 = arith.constant 0 : index
    %15 = vector.load %arg3[%c2, %c0_16, %c0_17] : memref<3x384x128xf32, #tpu.memory_space<vmem>>, vector<1x384x128xf32>
    %16 = vector.shape_cast %15 : vector<1x384x128xf32> to vector<384x128xf32>
    %cst_18 = arith.constant dense<0.000000e+00> : vector<128x128xf32>
    %17 = tpu.matmul %14, %16, %cst_18 {dimension_numbers = #tpu.dot_dimension_numbers<[1], [0], [0], [1], [0, 0, 1, 1], [], []>} : vector<128x384xf32>, vector<384x128xf32>, vector<128x128xf32> -> vector<128x128xf32>
    %18 = arith.addf %12, %17 : vector<128x128xf32>
    %c0_19 = arith.constant 0 : index
    %c0_20 = arith.constant 0 : index
    %c0_21 = arith.constant 0 : index
    %19 = vector.load %arg4[%c0_19, %c0_20, %c0_21] : memref<1x2x128xf32, #tpu.memory_space<vmem>>, vector<1x1x128xf32>
    %20 = vector.shape_cast %19 : vector<1x1x128xf32> to vector<1x128xf32>
    %21 = vector.broadcast %20 : vector<1x128xf32> to vector<128x128xf32>
    %22 = arith.mulf %18, %21 : vector<128x128xf32>
    %c0_22 = arith.constant 0 : index
    %c1_23 = arith.constant 1 : index
    %c0_24 = arith.constant 0 : index
    %23 = vector.load %arg4[%c0_22, %c1_23, %c0_24] : memref<1x2x128xf32, #tpu.memory_space<vmem>>, vector<1x1x128xf32>
    %24 = vector.shape_cast %23 : vector<1x1x128xf32> to vector<1x128xf32>
    %25 = vector.broadcast %24 : vector<1x128xf32> to vector<128x128xf32>
    %26 = arith.addf %22, %25 : vector<128x128xf32>
    %c0_25 = arith.constant 0 : index
    %c0_26 = arith.constant 0 : index
    %c0_27 = arith.constant 0 : index
    %27 = vector.load %arg5[%c0_25, %c0_26, %c0_27] : memref<1x128x128xf32, #tpu.memory_space<vmem>>, vector<1x128x128xf32>
    %28 = vector.shape_cast %27 : vector<1x128x128xf32> to vector<128x128xf32>
    %29 = vector.shape_cast %26 : vector<128x128xf32> to vector<1x128x128xf32>
    tpu.vector_store %arg5[%c0_25, %c0_26, %c0_27], %29 {strides = array<i32>} : memref<1x128x128xf32, #tpu.memory_space<vmem>>, vector<1x128x128xf32>,
    return
  }
  func.func @transform_0(%arg0: i32, %arg1: i32) -> (i32, i32, i32, i32) {
    %c0_i32 = arith.constant 0 : i32
    %c0_i32_0 = arith.constant 0 : i32
    %c0_i32_1 = arith.constant 0 : i32
    return %arg0, %arg1, %c0_i32, %c0_i32_0 : i32, i32, i32, i32
  }
  func.func @transform_1(%arg0: i32, %arg1: i32) -> (i32, i32, i32) {
    %c0_i32 = arith.constant 0 : i32
    %c0_i32_0 = arith.constant 0 : i32
    %c0_i32_1 = arith.constant 0 : i32
    %c0_i32_2 = arith.constant 0 : i32
    return %c0_i32, %c0_i32_0, %c0_i32_1 : i32, i32, i32
  }
  func.func @transform_2(%arg0: i32, %arg1: i32) -> (i32, i32, i32) {
    %c0_i32 = arith.constant 0 : i32
    %c0_i32_0 = arith.constant 0 : i32
    %c0_i32_1 = arith.constant 0 : i32
    return %arg0, %c0_i32, %c0_i32_0 : i32, i32, i32
  }
  func.func @transform_3(%arg0: i32, %arg1: i32) -> (i32, i32, i32) {
    %c0_i32 = arith.constant 0 : i32
    %c0_i32_0 = arith.constant 0 : i32
    return %arg0, %arg1, %c0_i32 : i32, i32, i32
  }
}

</mosaic_0001>

<llo_original>
// kernel: styled_f_conv_block.2
$region0: #{styled_f_conv_block.2}
  #allocation0 [shape = 'u32[]', space=smem, size = 0x4, offset = 0x4, fixed_abs, tag = 'smem constant byte address 0x4 - core index']
  #allocation1 [shape = 'u32[144,128]{1,0:T(1,128)}', space=vmem, size = 0x12000, scoped, tag = 'internal scratch']
  %s0 = inlined_call_operand.vmem [shape: f32[2,2,160,12], index: 0, kind: input, shape index: {}]
  %s1 = inlined_call_operand.vmem [shape: f32[3,12,128], index: 1, kind: input, shape index: {}]
  %s2 = inlined_call_operand.vmem [shape: f32[2,2,128], index: 2, kind: input, shape index: {}]
  %s3 = inlined_call_operand.vmem [shape: f32[2,256,128], index: 3, kind: output, shape index: {}]
  %s4 = sld [smem:[#allocation0]]
  $region45: #{styled_f_conv_block.2} parent=0
    _
  %s6 = ssub.s32 1, %s4
  %s7 = scalar_select 0, %s6, %s4
  loop: start=0, step=1, limit=6
  $region2: #{styled_f_conv_block.2} parent=0 // loop_pre_header
    _
  $region3: #{styled_f_conv_block.2} parent=0 // loop_header
    %s9 = sphi 0, %s13
    %p10 = scmp.ge.s32.totalorder %s9, 6
    %s16 = sphi 0, %s28
    %s17 = sphi 0, %s24
    %s18 = sphi 0, %s16
    %s19 = sphi 0, %s17
    %s20 = sphi 0, %s18
    %s21 = sphi 0, %s19
    %s33 = sphi 0, %s35
    %s36 = sphi 0, %s33
    %s37 = sphi 0, %s36
    %s53 = sphi 0, %s37
    %s57 = sphi 0, %s57
    %s59 = sphi 0, %s57
    %s60 = sphi 0, %s59
    %s74 = sphi 0, %s60
    %s80 = sphi 0, %s82
    %s83 = sphi 0, %s80
    %s84 = sphi 0, %s83
    %s100 = sphi 0, %s84
    %s108 = sphi 0, %s110
    %s111 = sphi 0, %s108
    %s112 = sphi 0, %s111
    %s128 = sphi 0, %s112
  $region4: #{styled_f_conv_block.2} parent=0 // loop_header_branch
    %12 = sbr.rel (%p10) target = $region8
  $region5: #{styled_f_conv_block.2} parent=0 // loop_body
    %s14 = ssub.s32 %s9, 1
    %s15 = ssub.s32 %s9, 2
    %s22 = sadd.s32 1, %s17
    %p23 = scmp.ge.s32.totalorder %s22, 2
    %s24 = scalar_select %p23, 0, %s22
    %s25 = sadd.s32 1, %s16
    %s26 = scalar_select %p23, %s25, %s16
    %p27 = scmp.ge.s32.totalorder %s26, 2
    %s28 = scalar_select %p27, 0, %s26
    %s29 = ssub.s32 %s16, %s28
    %s30 = ssub.s32 %s17, %s24
    %s31 = sor.u32 %s29, %s30
    %p32 = scmp.eq.s32.totalorder %s31, 0
    %s34 = sadd.s32 %s33, 1
    %s35 = scalar_select %p32, %s33, %s34
    %p38 = pneg %p32
    %p39 = scmp.eq.s32.totalorder %s9, 3
    %p40 = por %p38, %p39
    %p41 = scmp.ne.s32.totalorder %s33, %s36
    %p42 = scmp.eq.s32.totalorder %s9, 0
    %p43 = por %p41, %p42
    %p44 = scmp.ne.s32.totalorder %s33, %s36
    %p45 = scmp.eq.s32.totalorder %s14, 3
    %p46 = por %p44, %p45
    %p47 = scmp.ne.s32.totalorder %s36, %s37
    %p48 = scmp.eq.s32.totalorder %s14, 0
    %p49 = por %p47, %p48
    %p50 = scmp.ne.s32.totalorder %s36, %s37
    %p51 = scmp.eq.s32.totalorder %s15, 3
    %p52 = por %p50, %p51
    %p54 = scmp.ne.s32.totalorder %s37, %s53
    %p55 = scmp.eq.s32.totalorder %s15, 0
    %p56 = por %p54, %p55
    %s58 = sadd.s32 %s57, 1
    %p61 = scmp.eq.s32.totalorder %s9, 3
    %p62 = scmp.ne.s32.totalorder %s57, %s59
    %p63 = scmp.eq.s32.totalorder %s9, 0
    %p64 = por %p62, %p63
    %p65 = scmp.ne.s32.totalorder %s57, %s59
    %p66 = scmp.eq.s32.totalorder %s14, 3
    %p67 = por %p65, %p66
    %p68 = scmp.ne.s32.totalorder %s59, %s60
    %p69 = scmp.eq.s32.totalorder %s14, 0
    %p70 = por %p68, %p69
    %p71 = scmp.ne.s32.totalorder %s59, %s60
    %p72 = scmp.eq.s32.totalorder %s15, 3
    %p73 = por %p71, %p72
    %p75 = scmp.ne.s32.totalorder %s60, %s74
    %p76 = scmp.eq.s32.totalorder %s15, 0
    %p77 = por %p75, %p76
    %s78 = ssub.s32 %s16, %s28
    %p79 = scmp.eq.s32.totalorder %s78, 0
    %s81 = sadd.s32 %s80, 1
    %s82 = scalar_select %p79, %s80, %s81
    %p85 = pneg %p79
    %p86 = scmp.eq.s32.totalorder %s9, 3
    %p87 = por %p85, %p86
    %p88 = scmp.ne.s32.totalorder %s80, %s83
    %p89 = scmp.eq.s32.totalorder %s9, 0
    %p90 = por %p88, %p89
    %p91 = scmp.ne.s32.totalorder %s80, %s83
    %p92 = scmp.eq.s32.totalorder %s14, 3
    %p93 = por %p91, %p92
    %p94 = scmp.ne.s32.totalorder %s83, %s84
    %p95 = scmp.eq.s32.totalorder %s14, 0
    %p96 = por %p94, %p95
    %p97 = scmp.ne.s32.totalorder %s83, %s84
    %p98 = scmp.eq.s32.totalorder %s15, 3
    %p99 = por %p97, %p98
    %p101 = scmp.ne.s32.totalorder %s84, %s100
    %p102 = scmp.eq.s32.totalorder %s15, 0
    %p103 = por %p101, %p102
    %s104 = ssub.s32 %s16, %s28
    %s105 = ssub.s32 %s17, %s24
    %s106 = sor.u32 %s104, %s105
    %p107 = scmp.eq.s32.totalorder %s106, 0
    %s109 = sadd.s32 %s108, 1
    %s110 = scalar_select %p107, %s108, %s109
    %p113 = pneg %p107
    %p114 = scmp.eq.s32.totalorder %s9, 3
    %p115 = por %p113, %p114
    %p116 = scmp.ne.s32.totalorder %s108, %s111
    %p117 = scmp.eq.s32.totalorder %s9, 0
    %p118 = por %p116, %p117
    %p119 = scmp.ne.s32.totalorder %s108, %s111
    %p120 = scmp.eq.s32.totalorder %s14, 3
    %p121 = por %p119, %p120
    %p122 = scmp.ne.s32.totalorder %s111, %s112
    %p123 = scmp.eq.s32.totalorder %s14, 0
    %p124 = por %p122, %p123
    %p125 = scmp.ne.s32.totalorder %s111, %s112
    %p126 = scmp.eq.s32.totalorder %s15, 3
    %p127 = por %p125, %p126
    %p129 = scmp.ne.s32.totalorder %s112, %s128
    %p130 = scmp.eq.s32.totalorder %s15, 0
    %p131 = por %p129, %p130
    %p132 = scmp.le.s32.totalorder 1, %s9
    %p133 = scmp.lt.s32.totalorder %s9, 5
    %p134 = pnand %p132, %p133
    %p135 = pneg %p134
    // Predicated region
    $region9: #{styled_f_conv_block.2} parent=5 // pred_check
      _
    $region10: #{styled_f_conv_block.2} parent=5 // pred_check_branch
      %137 = sbr.rel (%p134) target = $region12
    $region11: #{styled_f_conv_block.2} parent=5 // pred_region
      %s138 = ssub.s32 %s9, 1
      // Predicated region
      $region13: #{styled_f_conv_block.2} parent=11 // pred_check
        %p139 = pneg %p70
      $region14: #{styled_f_conv_block.2} parent=11 // pred_check_branch
        %141 = sbr.rel (%p139) target = $region16
      $region15: #{styled_f_conv_block.2} parent=11 // pred_region
        _
      $region16: #{styled_f_conv_block.2} parent=11 // pred_fallthru
        _
    $region12: #{styled_f_conv_block.2} parent=5 // pred_fallthru
      _
    %p142 = scmp.lt.s32.totalorder %s9, 4
    // Predicated region
    $region17: #{styled_f_conv_block.2} parent=5 // pred_check
      %p143 = pneg %p142
    $region18: #{styled_f_conv_block.2} parent=5 // pred_check_branch
      %145 = sbr.rel (%p143) target = $region20
    $region19: #{styled_f_conv_block.2} parent=5 // pred_region
      // Predicated region
      $region21: #{styled_f_conv_block.2} parent=19 // pred_check
        %p146 = pneg %p43
      $region22: #{styled_f_conv_block.2} parent=19 // pred_check_branch
        %148 = sbr.rel (%p146) target = $region24
      $region23: #{styled_f_conv_block.2} parent=19 // pred_region
        %p149 = scmp.lt.s32.totalorder %s16, 1
        %s150 = scalar_select %p149, %s16, 1
        %p151 = scmp.lt.s32.totalorder %s17, 1
        %s152 = scalar_select %p151, %s17, 1
        %s153 = smul.addr %s152, 20
        %s154 = smul.addr %s150, 40
        %s155 = sadd.s32 %s153, %s154
        %s156 = smul.addr %s155, 8
        %s157 = scalar_lea.vmem %s0, %s156
      $region24: #{styled_f_conv_block.2} parent=19 // pred_fallthru
        _
      // Predicated region
      $region25: #{styled_f_conv_block.2} parent=19 // pred_check
        %p158 = pneg %p90
      $region26: #{styled_f_conv_block.2} parent=19 // pred_check_branch
        %160 = sbr.rel (%p158) target = $region28
      $region27: #{styled_f_conv_block.2} parent=19 // pred_region
        %p161 = scmp.lt.s32.totalorder %s16, 1
        %s162 = scalar_select %p161, %s16, 1
        %s163 = smul.addr %s162, 2
        %s164 = scalar_lea.vmem %s2, %s163
      $region28: #{styled_f_conv_block.2} parent=19 // pred_fallthru
        _
    $region20: #{styled_f_conv_block.2} parent=5 // pred_fallthru
      _
    %p165 = scmp.le.s32.totalorder 1, %s9
    %p166 = scmp.lt.s32.totalorder %s9, 5
    %p167 = pnand %p165, %p166
    %p168 = pneg %p167
    // Predicated region
    $region29: #{styled_f_conv_block.2} parent=5 // pred_check
      _
    $region30: #{styled_f_conv_block.2} parent=5 // pred_check_branch
      %170 = sbr.rel (%p167) target = $region32
    $region31: #{styled_f_conv_block.2} parent=5 // pred_region
      %s171 = ssub.s32 %s9, 1
      %p172 = scmp.lt.s32.totalorder %s18, 1
      %s173 = scalar_select %p172, %s18, 1
      %p174 = scmp.lt.s32.totalorder %s19, 1
      %s175 = scalar_select %p174, %s19, 1
      %s176 = smul.addr %s175, 20
      %s177 = smul.addr %s173, 40
      %s178 = sadd.s32 %s176, %s177
      %s179 = smul.addr %s178, 8
      %s180 = scalar_lea.vmem %s0, %s179
      %p181 = pneg %p49
      %p182 = pneg %p46
      %p183 = pneg %p70
      %p184 = pneg %p67
      %p185 = scmp.lt.s32.totalorder %s18, 1
      %s186 = scalar_select %p185, %s18, 1
      %s187 = smul.addr %s186, 2
      %s188 = scalar_lea.vmem %s2, %s187
      %p189 = pneg %p96
      %p190 = pneg %p93
      %p191 = pneg %p124
      %p192 = pneg %p121
      %s193 = smul.u32 16, %s19
      %p194 = scmp.lt.s32.totalorder %s18, 1
      %s195 = scalar_select %p194, %s18, 1
      %p196 = scmp.lt.s32.totalorder %s193, 31
      %s197 = scalar_select %p196, %s193, 31
      %s198 = smul.addr %s195, 32
      %s199 = sadd.s32 %s197, %s198
      %s200 = smul.addr %s199, 8
      %s201 = scalar_lea.vmem %s3, %s200
      %p202 = scmp.lt.s32.totalorder %s18, 1
      %s203 = scalar_select %p202, %s18, 1
      %p204 = scmp.lt.s32.totalorder %s19, 1
      %s205 = scalar_select %p204, %s19, 1
      %s206 = smul.addr %s205, 20
      %s207 = smul.addr %s203, 40
      %s208 = sadd.s32 %s206, %s207
      %s209 = smul.addr %s208, 8
      %s210 = scalar_lea.vmem %s0, %s209
      %p211 = scmp.lt.s32.totalorder %s18, 1
      %s212 = scalar_select %p211, %s18, 1
      %s213 = smul.addr %s212, 2
      %s214 = scalar_lea.vmem %s2, %s213
      %s215 = smul.u32 16, %s19
      %p216 = scmp.lt.s32.totalorder %s18, 1
      %s217 = scalar_select %p216, %s18, 1
      %p218 = scmp.lt.s32.totalorder %s215, 31
      %s219 = scalar_select %p218, %s215, 31
      %s220 = smul.addr %s217, 32
      %s221 = sadd.s32 %s219, %s220
      %s222 = smul.addr %s221, 8
      %s223 = scalar_lea.vmem %s3, %s222
      %s224 = smul.u32 16, %s19
      %v225 = vld [vmem:[%s210] sm:$0xff]
      %v226 = vld [vmem:[%s210 + $0x8] sm:$0xff]
      %v227 = vld [vmem:[%s210 + $0x10] sm:$0xff]
      %v228 = vld [vmem:[%s210 + $0x18] sm:$0xff]
      %v229 = vld [vmem:[%s210 + $0x20] sm:$0xff]
      %v230 = vld [vmem:[%s210 + $0x28] sm:$0xff]
      %v231 = vld [vmem:[%s210 + $0x30] sm:$0xff]
      %v232 = vld [vmem:[%s210 + $0x38] sm:$0xff]
      %v233 = vld [vmem:[%s210 + $0x40] sm:$0xff]
      %v234 = vld [vmem:[%s210 + $0x48] sm:$0xff]
      %v235 = vld [vmem:[%s210 + $0x50] sm:$0xff]
      %v236 = vld [vmem:[%s210 + $0x58] sm:$0xff]
      %v237 = vld [vmem:[%s210 + $0x60] sm:$0xff]
      %v238 = vld [vmem:[%s210 + $0x68] sm:$0xff]
      %v239 = vld [vmem:[%s210 + $0x70] sm:$0xff]
      %v240 = vld [vmem:[%s210 + $0x78] sm:$0xff]
      %v241 = vld [vmem:[%s1] sm:$0xff]
      %v242 = vld [vmem:[%s1 + $0x8] sm:$0xf]
      %v243 = vld [vmem:[%s210 + $0x80] sm:$0xff]
      %v244 = vld [vmem:[%s210 + $0x88] sm:$0xff]
      %s245 = scalar_lea.vmem %s1, 16
      %v246 = vld [vmem:[%s245] sm:$0xff]
      %v247 = vld [vmem:[%s245 + $0x8] sm:$0xf]
      %vm248 = vcmask 97280
      %v250 = vsel %vm248, %v227, 0
      %v253 = vsel %vm248, %v228, 0
      %v256 = vsel %vm248, %v229, 0
      %v259 = vsel %vm248, %v230, 0
      %v262 = vsel %vm248, %v231, 0
      %v265 = vsel %vm248, %v232, 0
      %v268 = vsel %vm248, %v233, 0
      %v271 = vsel %vm248, %v234, 0
      %v274 = vsel %vm248, %v235, 0
      %v277 = vsel %vm248, %v236, 0
      %v280 = vsel %vm248, %v237, 0
      %v283 = vsel %vm248, %v238, 0
      %v286 = vsel %vm248, %v239, 0
      %v289 = vsel %vm248, %v240, 0
      %v292 = vsel %vm248, %v243, 0
      %v295 = vsel %vm248, %v244, 0
      %vm297 = vcmask 1043456
      %v299 = vsel %vm297, %v247, 0
      %301 = vmatprep.subr.mxu0 0.0
      %302 = vmatpush1.msra.mxu0 0.0
      %303 = vmatprep.subr.mxu0 0.0
      %304 = vmatpush1.msra.mxu0 0.0
      %305 = vmatprep.subr.mxu0 0.0
      %306 = vmatpush1.msra.mxu0 0.0
      %307 = vmatprep.subr.mxu0 0.0
      %308 = vmatpush1.msra.mxu0 0.0
      %309 = vmatprep.subr.mxu0 0.0
      %310 = vmatpush1.msra.mxu0 0.0
      %311 = vmatprep.subr.mxu0 0.0
      %312 = vmatpush1.msra.mxu0 0.0
      %313 = vmatprep.subr.mxu0 0.0
      %314 = vmatpush1.msra.mxu0 0.0
      %315 = vmatprep.subr.mxu0 0.0
      %316 = vmatpush1.msra.mxu0 0.0
      %317 = vmatprep.subr.mxu0 0.0
      %318 = vmatpush1.msra.mxu0 0.0
      %319 = vmatprep.subr.mxu0 0.0
      %320 = vmatpush1.msra.mxu0 0.0
      %321 = vmatprep.subr.mxu0 0.0
      %322 = vmatpush1.msra.mxu0 0.0
      %323 = vmatprep.subr.mxu0 0.0
      %324 = vmatpush1.msra.mxu0 0.0
      %325 = vmatprep.subr.mxu0 0.0
      %326 = vmatpush1.msra.mxu0 0.0
      %327 = vmatprep.subr.mxu0 0.0
      %328 = vmatpush1.msra.mxu0 0.0
      %329 = vmatprep.subr.mxu0 0.0
      %330 = vmatpush1.msra.mxu0 %v299
      %331 = vmatprep.subr.mxu0 0.0
      %332 = vmatpush1.msra.mxu0 %v246
      %333 = vmatprep.subr.mxu0 0.0
      %334 = vmatpush2.msra.mxu0 0.0
      %335 = vmatprep.subr.mxu0 0.0
      %336 = vmatpush2.msra.mxu0 0.0
      %337 = vmatprep.subr.mxu0 0.0
      %338 = vmatpush2.msra.mxu0 0.0
      %339 = vmatprep.subr.mxu0 0.0
      %340 = vmatpush2.msra.mxu0 0.0
      %341 = vmatprep.subr.mxu0 0.0
      %342 = vmatpush2.msra.mxu0 0.0
      %343 = vmatprep.subr.mxu0 0.0
      %344 = vmatpush2.msra.mxu0 0.0
      %345 = vmatprep.subr.mxu0 0.0
      %346 = vmatpush2.msra.mxu0 0.0
      %347 = vmatprep.subr.mxu0 0.0
      %348 = vmatpush2.msra.mxu0 0.0
      %349 = vmatprep.subr.mxu0 0.0
      %350 = vmatpush2.msra.mxu0 0.0
      %351 = vmatprep.subr.mxu0 0.0
      %352 = vmatpush2.msra.mxu0 0.0
      %353 = vmatprep.subr.mxu0 0.0
      %354 = vmatpush2.msra.mxu0 0.0
      %355 = vmatprep.subr.mxu0 0.0
      %356 = vmatpush2.msra.mxu0 0.0
      %357 = vmatprep.subr.mxu0 0.0
      %358 = vmatpush2.msra.mxu0 0.0
      %359 = vmatprep.subr.mxu0 0.0
      %360 = vmatpush2.msra.mxu0 0.0
      %361 = vmatprep.subr.mxu0 0.0
      %362 = vmatpush2.msra.mxu0 0.0
      %363 = vmatprep.subr.mxu0 0.0
      %364 = vmatpush2.msra.mxu0 0.0
      %365 = vmatprep.mubr.f32.mxu0 0.0
      %366 = vmatmul.mubr.f32.gmra.mxu0 %v250
      %v367 = vpop.f32.mrf.mxu0
      %v368 = vadd.f32 0.0, %v367
      %v369 = vpop.f32.mrf.mxu0
      %370 = vmatprep.mubr.f32.mxu0 0.0
      %371 = vmatmul.mubr.f32.gmra.mxu0 %v253
      %v372 = vpop.f32.mrf.mxu0
      %v373 = vadd.f32 0.0, %v372
      %v374 = vpop.f32.mrf.mxu0
      %375 = vmatprep.mubr.f32.mxu0 0.0
      %376 = vmatmul.mubr.f32.gmra.mxu0 %v256
      %v377 = vpop.f32.mrf.mxu0
      %v378 = vadd.f32 0.0, %v377
      %v379 = vpop.f32.mrf.mxu0
      %380 = vmatprep.mubr.f32.mxu0 0.0
      %381 = vmatmul.mubr.f32.gmra.mxu0 %v259
      %v382 = vpop.f32.mrf.mxu0
      %v383 = vadd.f32 0.0, %v382
      %v384 = vpop.f32.mrf.mxu0
      %385 = vmatprep.mubr.f32.mxu0 0.0
      %386 = vmatmul.mubr.f32.gmra.mxu0 %v262
      %v387 = vpop.f32.mrf.mxu0
      %v388 = vadd.f32 0.0, %v387
      %v389 = vpop.f32.mrf.mxu0
      %390 = vmatprep.mubr.f32.mxu0 0.0
      %391 = vmatmul.mubr.f32.gmra.mxu0 %v265
      %v392 = vpop.f32.mrf.mxu0
      %v393 = vadd.f32 0.0, %v392
      %v394 = vpop.f32.mrf.mxu0
      %395 = vmatprep.mubr.f32.mxu0 0.0
      %396 = vmatmul.mubr.f32.gmra.mxu0 %v268
      %v397 = vpop.f32.mrf.mxu0
      %v398 = vadd.f32 0.0, %v397
      %v399 = vpop.f32.mrf.mxu0
      %400 = vmatprep.mubr.f32.mxu0 0.0
      %401 = vmatmul.mubr.f32.gmra.mxu0 %v271
      %v402 = vpop.f32.mrf.mxu0
      %v403 = vadd.f32 0.0, %v402
      %v404 = vpop.f32.mrf.mxu0
      %405 = vmatprep.mubr.f32.mxu0 0.0
      %406 = vmatmul.mubr.f32.gmra.mxu0 %v274
      %v407 = vpop.f32.mrf.mxu0
      %v408 = vadd.f32 0.0, %v407
      %v409 = vpop.f32.mrf.mxu0
      %410 = vmatprep.mubr.f32.mxu0 0.0
      %411 = vmatmul.mubr.f32.gmra.mxu0 %v277
      %v412 = vpop.f32.mrf.mxu0
      %v413 = vadd.f32 0.0, %v412
      %v414 = vpop.f32.mrf.mxu0
      %415 = vmatprep.mubr.f32.mxu0 0.0
      %416 = vmatmul.mubr.f32.gmra.mxu0 %v280
      %v417 = vpop.f32.mrf.mxu0
      %v418 = vadd.f32 0.0, %v417
      %v419 = vpop.f32.mrf.mxu0
      %420 = vmatprep.mubr.f32.mxu0 0.0
      %421 = vmatmul.mubr.f32.gmra.mxu0 %v283
      %v422 = vpop.f32.mrf.mxu0
      %v423 = vadd.f32 0.0, %v422
      %v424 = vpop.f32.mrf.mxu0
      %425 = vmatprep.mubr.f32.mxu0 0.0
      %426 = vmatmul.mubr.f32.gmra.mxu0 %v286
      %v427 = vpop.f32.mrf.mxu0
      %v428 = vadd.f32 0.0, %v427
      %v429 = vpop.f32.mrf.mxu0
      %430 = vmatprep.mubr.f32.mxu0 0.0
      %431 = vmatmul.mubr.f32.gmra.mxu0 %v289
      %v432 = vpop.f32.mrf.mxu0
      %v433 = vadd.f32 0.0, %v432
      %v434 = vpop.f32.mrf.mxu0
      %435 = vmatprep.mubr.f32.mxu0 0.0
      %436 = vmatmul.mubr.f32.gmra.mxu0 %v292
      %v437 = vpop.f32.mrf.mxu0
      %v438 = vadd.f32 0.0, %v437
      %v439 = vpop.f32.mrf.mxu0
      %440 = vmatprep.mubr.f32.mxu0 0.0
      %441 = vmatmul.mubr.f32.gmra.mxu0 %v295
      %v442 = vpop.f32.mrf.mxu0
      %v443 = vadd.f32 0.0, %v442
      %v444 = vpop.f32.mrf.mxu0
      %445 = vdwg.mxu0
      %v447 = vsel %vm248, %v225, 0
      %v450 = vsel %vm248, %v226, 0
      %v453 = vsel %vm297, %v242, 0
      %455 = vmatprep.subr.mxu0 0.0
      %456 = vmatpush1.msra.mxu0 0.0
      %457 = vmatprep.subr.mxu0 0.0
      %458 = vmatpush1.msra.mxu0 0.0
      %459 = vmatprep.subr.mxu0 0.0
      %460 = vmatpush1.msra.mxu0 0.0
      %461 = vmatprep.subr.mxu0 0.0
      %462 = vmatpush1.msra.mxu0 0.0
      %463 = vmatprep.subr.mxu0 0.0
      %464 = vmatpush1.msra.mxu0 0.0
      %465 = vmatprep.subr.mxu0 0.0
      %466 = vmatpush1.msra.mxu0 0.0
      %467 = vmatprep.subr.mxu0 0.0
      %468 = vmatpush1.msra.mxu0 0.0
      %469 = vmatprep.subr.mxu0 0.0
      %470 = vmatpush1.msra.mxu0 0.0
      %471 = vmatprep.subr.mxu0 0.0
      %472 = vmatpush1.msra.mxu0 0.0
      %473 = vmatprep.subr.mxu0 0.0
      %474 = vmatpush1.msra.mxu0 0.0
      %475 = vmatprep.subr.mxu0 0.0
      %476 = vmatpush1.msra.mxu0 0.0
      %477 = vmatprep.subr.mxu0 0.0
      %478 = vmatpush1.msra.mxu0 0.0
      %479 = vmatprep.subr.mxu0 0.0
      %480 = vmatpush1.msra.mxu0 0.0
      %481 = vmatprep.subr.mxu0 0.0
      %482 = vmatpush1.msra.mxu0 0.0
      %483 = vmatprep.subr.mxu0 0.0
      %484 = vmatpush1.msra.mxu0 %v453
      %485 = vmatprep.subr.mxu0 0.0
      %486 = vmatpush1.msra.mxu0 %v241
      %487 = vmatprep.subr.mxu0 0.0
      %488 = vmatpush2.msra.mxu0 0.0
      %489 = vmatprep.subr.mxu0 0.0
      %490 = vmatpush2.msra.mxu0 0.0
      %491 = vmatprep.subr.mxu0 0.0
      %492 = vmatpush2.msra.mxu0 0.0
      %493 = vmatprep.subr.mxu0 0.0
      %494 = vmatpush2.msra.mxu0 0.0
      %495 = vmatprep.subr.mxu0 0.0
      %496 = vmatpush2.msra.mxu0 0.0
      %497 = vmatprep.subr.mxu0 0.0
      %498 = vmatpush2.msra.mxu0 0.0
      %499 = vmatprep.subr.mxu0 0.0
      %500 = vmatpush2.msra.mxu0 0.0
      %501 = vmatprep.subr.mxu0 0.0
      %502 = vmatpush2.msra.mxu0 0.0
      %503 = vmatprep.subr.mxu0 0.0
      %504 = vmatpush2.msra.mxu0 0.0
      %505 = vmatprep.subr.mxu0 0.0
      %506 = vmatpush2.msra.mxu0 0.0
      %507 = vmatprep.subr.mxu0 0.0
      %508 = vmatpush2.msra.mxu0 0.0
      %509 = vmatprep.subr.mxu0 0.0
      %510 = vmatpush2.msra.mxu0 0.0
      %511 = vmatprep.subr.mxu0 0.0
      %512 = vmatpush2.msra.mxu0 0.0
      %513 = vmatprep.subr.mxu0 0.0
      %514 = vmatpush2.msra.mxu0 0.0
      %515 = vmatprep.subr.mxu0 0.0
      %516 = vmatpush2.msra.mxu0 0.0
      %517 = vmatprep.subr.mxu0 0.0
      %518 = vmatpush2.msra.mxu0 0.0
      %519 = vmatprep.mubr.f32.mxu0 0.0
      %520 = vmatmul.mubr.f32.gmra.mxu0 %v447
      %v521 = vpop.f32.mrf.mxu0
      %v522 = vadd.f32 %v368, %v521
      %v523 = vpop.f32.mrf.mxu0
      %524 = vmatprep.mubr.f32.mxu0 0.0
      %525 = vmatmul.mubr.f32.gmra.mxu0 %v450
      %v526 = vpop.f32.mrf.mxu0
      %v527 = vadd.f32 %v373, %v526
      %v528 = vpop.f32.mrf.mxu0
      %529 = vmatprep.mubr.f32.mxu0 0.0
      %530 = vmatmul.mubr.f32.gmra.mxu0 %v250
      %v531 = vpop.f32.mrf.mxu0
      %v532 = vadd.f32 %v378, %v531
      %v533 = vpop.f32.mrf.mxu0
      %534 = vmatprep.mubr.f32.mxu0 0.0
      %535 = vmatmul.mubr.f32.gmra.mxu0 %v253
      %v536 = vpop.f32.mrf.mxu0
      %v537 = vadd.f32 %v383, %v536
      %v538 = vpop.f32.mrf.mxu0
      %539 = vmatprep.mubr.f32.mxu0 0.0
      %540 = vmatmul.mubr.f32.gmra.mxu0 %v256
      %v541 = vpop.f32.mrf.mxu0
      %v542 = vadd.f32 %v388, %v541
      %v543 = vpop.f32.mrf.mxu0
      %544 = vmatprep.mubr.f32.mxu0 0.0
      %545 = vmatmul.mubr.f32.gmra.mxu0 %v259
      %v546 = vpop.f32.mrf.mxu0
      %v547 = vadd.f32 %v393, %v546
      %v548 = vpop.f32.mrf.mxu0
      %549 = vmatprep.mubr.f32.mxu0 0.0
      %550 = vmatmul.mubr.f32.gmra.mxu0 %v262
      %v551 = vpop.f32.mrf.mxu0
      %v552 = vadd.f32 %v398, %v551
      %v553 = vpop.f32.mrf.mxu0
      %554 = vmatprep.mubr.f32.mxu0 0.0
      %555 = vmatmul.mubr.f32.gmra.mxu0 %v265
      %v556 = vpop.f32.mrf.mxu0
      %v557 = vadd.f32 %v403, %v556
      %v558 = vpop.f32.mrf.mxu0
      %559 = vmatprep.mubr.f32.mxu0 0.0
      %560 = vmatmul.mubr.f32.gmra.mxu0 %v268
      %v561 = vpop.f32.mrf.mxu0
      %v562 = vadd.f32 %v408, %v561
      %v563 = vpop.f32.mrf.mxu0
      %564 = vmatprep.mubr.f32.mxu0 0.0
      %565 = vmatmul.mubr.f32.gmra.mxu0 %v271
      %v566 = vpop.f32.mrf.mxu0
      %v567 = vadd.f32 %v413, %v566
      %v568 = vpop.f32.mrf.mxu0
      %569 = vmatprep.mubr.f32.mxu0 0.0
      %570 = vmatmul.mubr.f32.gmra.mxu0 %v274
      %v571 = vpop.f32.mrf.mxu0
      %v572 = vadd.f32 %v418, %v571
      %v573 = vpop.f32.mrf.mxu0
      %574 = vmatprep.mubr.f32.mxu0 0.0
      %575 = vmatmul.mubr.f32.gmra.mxu0 %v277
      %v576 = vpop.f32.mrf.mxu0
      %v577 = vadd.f32 %v423, %v576
      %v578 = vpop.f32.mrf.mxu0
      %579 = vmatprep.mubr.f32.mxu0 0.0
      %580 = vmatmul.mubr.f32.gmra.mxu0 %v280
      %v581 = vpop.f32.mrf.mxu0
      %v582 = vadd.f32 %v428, %v581
      %v583 = vpop.f32.mrf.mxu0
      %584 = vmatprep.mubr.f32.mxu0 0.0
      %585 = vmatmul.mubr.f32.gmra.mxu0 %v283
      %v586 = vpop.f32.mrf.mxu0
      %v587 = vadd.f32 %v433, %v586
      %v588 = vpop.f32.mrf.mxu0
      %589 = vmatprep.mubr.f32.mxu0 0.0
      %590 = vmatmul.mubr.f32.gmra.mxu0 %v286
      %v591 = vpop.f32.mrf.mxu0
      %v592 = vadd.f32 %v438, %v591
      %v593 = vpop.f32.mrf.mxu0
      %594 = vmatprep.mubr.f32.mxu0 0.0
      %595 = vmatmul.mubr.f32.gmra.mxu0 %v289
      %v596 = vpop.f32.mrf.mxu0
      %v597 = vadd.f32 %v443, %v596
      %v598 = vpop.f32.mrf.mxu0
      %599 = vdwg.mxu0
      %v600 = vld [vmem:[%s210 + $0x20] sm:$0xff]
      %v601 = vld [vmem:[%s210 + $0x28] sm:$0xff]
      %v602 = vld [vmem:[%s210 + $0x30] sm:$0xff]
      %v603 = vld [vmem:[%s210 + $0x38] sm:$0xff]
      %v604 = vld [vmem:[%s210 + $0x40] sm:$0xff]
      %v605 = vld [vmem:[%s210 + $0x48] sm:$0xff]
      %v606 = vld [vmem:[%s210 + $0x50] sm:$0xff]
      %v607 = vld [vmem:[%s210 + $0x58] sm:$0xff]
      %v608 = vld [vmem:[%s210 + $0x60] sm:$0xff]
      %v609 = vld [vmem:[%s210 + $0x68] sm:$0xff]
      %v610 = vld [vmem:[%s210 + $0x70] sm:$0xff]
      %v611 = vld [vmem:[%s210 + $0x78] sm:$0xff]
      %v612 = vld [vmem:[%s210 + $0x80] sm:$0xff]
      %v613 = vld [vmem:[%s210 + $0x88] sm:$0xff]
      %v614 = vld [vmem:[%s210 + $0x90] sm:$0xff]
      %v615 = vld [vmem:[%s210 + $0x98] sm:$0xff]
      %s616 = scalar_lea.vmem %s1, 32
      %v617 = vld [vmem:[%s616] sm:$0xff]
      %v618 = vld [vmem:[%s616 + $0x8] sm:$0xf]
      %v620 = vsel %vm248, %v600, 0
      %v623 = vsel %vm248, %v601, 0
      %v626 = vsel %vm248, %v602, 0
      %v629 = vsel %vm248, %v603, 0
      %v632 = vsel %vm248, %v604, 0
      %v635 = vsel %vm248, %v605, 0
      %v638 = vsel %vm248, %v606, 0
      %v641 = vsel %vm248, %v607, 0
      %v644 = vsel %vm248, %v608, 0
      %v647 = vsel %vm248, %v609, 0
      %v650 = vsel %vm248, %v610, 0
      %v653 = vsel %vm248, %v611, 0
      %v656 = vsel %vm248, %v612, 0
      %v659 = vsel %vm248, %v613, 0
      %v662 = vsel %vm248, %v614, 0
      %v665 = vsel %vm248, %v615, 0
      %v668 = vsel %vm297, %v618, 0
      %670 = vmatprep.subr.mxu0 0.0
      %671 = vmatpush1.msra.mxu0 0.0
      %672 = vmatprep.subr.mxu0 0.0
      %673 = vmatpush1.msra.mxu0 0.0
      %674 = vmatprep.subr.mxu0 0.0
      %675 = vmatpush1.msra.mxu0 0.0
      %676 = vmatprep.subr.mxu0 0.0
      %677 = vmatpush1.msra.mxu0 0.0
      %678 = vmatprep.subr.mxu0 0.0
      %679 = vmatpush1.msra.mxu0 0.0
      %680 = vmatprep.subr.mxu0 0.0
      %681 = vmatpush1.msra.mxu0 0.0
      %682 = vmatprep.subr.mxu0 0.0
      %683 = vmatpush1.msra.mxu0 0.0
      %684 = vmatprep.subr.mxu0 0.0
      %685 = vmatpush1.msra.mxu0 0.0
      %686 = vmatprep.subr.mxu0 0.0
      %687 = vmatpush1.msra.mxu0 0.0
      %688 = vmatprep.subr.mxu0 0.0
      %689 = vmatpush1.msra.mxu0 0.0
      %690 = vmatprep.subr.mxu0 0.0
      %691 = vmatpush1.msra.mxu0 0.0
      %692 = vmatprep.subr.mxu0 0.0
      %693 = vmatpush1.msra.mxu0 0.0
      %694 = vmatprep.subr.mxu0 0.0
      %695 = vmatpush1.msra.mxu0 0.0
      %696 = vmatprep.subr.mxu0 0.0
      %697 = vmatpush1.msra.mxu0 0.0
      %698 = vmatprep.subr.mxu0 0.0
      %699 = vmatpush1.msra.mxu0 %v668
      %700 = vmatprep.subr.mxu0 0.0
      %701 = vmatpush1.msra.mxu0 %v617
      %702 = vmatprep.subr.mxu0 0.0
      %703 = vmatpush2.msra.mxu0 0.0
      %704 = vmatprep.subr.mxu0 0.0
      %705 = vmatpush2.msra.mxu0 0.0
      %706 = vmatprep.subr.mxu0 0.0
      %707 = vmatpush2.msra.mxu0 0.0
      %708 = vmatprep.subr.mxu0 0.0
      %709 = vmatpush2.msra.mxu0 0.0
      %710 = vmatprep.subr.mxu0 0.0
      %711 = vmatpush2.msra.mxu0 0.0
      %712 = vmatprep.subr.mxu0 0.0
      %713 = vmatpush2.msra.mxu0 0.0
      %714 = vmatprep.subr.mxu0 0.0
      %715 = vmatpush2.msra.mxu0 0.0
      %716 = vmatprep.subr.mxu0 0.0
      %717 = vmatpush2.msra.mxu0 0.0
      %718 = vmatprep.subr.mxu0 0.0
      %719 = vmatpush2.msra.mxu0 0.0
      %720 = vmatprep.subr.mxu0 0.0
      %721 = vmatpush2.msra.mxu0 0.0
      %722 = vmatprep.subr.mxu0 0.0
      %723 = vmatpush2.msra.mxu0 0.0
      %724 = vmatprep.subr.mxu0 0.0
      %725 = vmatpush2.msra.mxu0 0.0
      %726 = vmatprep.subr.mxu0 0.0
      %727 = vmatpush2.msra.mxu0 0.0
      %728 = vmatprep.subr.mxu0 0.0
      %729 = vmatpush2.msra.mxu0 0.0
      %730 = vmatprep.subr.mxu0 0.0
      %731 = vmatpush2.msra.mxu0 0.0
      %732 = vmatprep.subr.mxu0 0.0
      %733 = vmatpush2.msra.mxu0 0.0
      %734 = vmatprep.mubr.f32.mxu0 0.0
      %735 = vmatmul.mubr.f32.gmra.mxu0 %v620
      %v736 = vpop.f32.mrf.mxu0
      %v737 = vadd.f32 0.0, %v736
      %v738 = vpop.f32.mrf.mxu0
      %739 = vmatprep.mubr.f32.mxu0 0.0
      %740 = vmatmul.mubr.f32.gmra.mxu0 %v623
      %v741 = vpop.f32.mrf.mxu0
      %v742 = vadd.f32 0.0, %v741
      %v743 = vpop.f32.mrf.mxu0
      %744 = vmatprep.mubr.f32.mxu0 0.0
      %745 = vmatmul.mubr.f32.gmra.mxu0 %v626
      %v746 = vpop.f32.mrf.mxu0
      %v747 = vadd.f32 0.0, %v746
      %v748 = vpop.f32.mrf.mxu0
      %749 = vmatprep.mubr.f32.mxu0 0.0
      %750 = vmatmul.mubr.f32.gmra.mxu0 %v629
      %v751 = vpop.f32.mrf.mxu0
      %v752 = vadd.f32 0.0, %v751
      %v753 = vpop.f32.mrf.mxu0
      %754 = vmatprep.mubr.f32.mxu0 0.0
      %755 = vmatmul.mubr.f32.gmra.mxu0 %v632
      %v756 = vpop.f32.mrf.mxu0
      %v757 = vadd.f32 0.0, %v756
      %v758 = vpop.f32.mrf.mxu0
      %759 = vmatprep.mubr.f32.mxu0 0.0
      %760 = vmatmul.mubr.f32.gmra.mxu0 %v635
      %v761 = vpop.f32.mrf.mxu0
      %v762 = vadd.f32 0.0, %v761
      %v763 = vpop.f32.mrf.mxu0
      %764 = vmatprep.mubr.f32.mxu0 0.0
      %765 = vmatmul.mubr.f32.gmra.mxu0 %v638
      %v766 = vpop.f32.mrf.mxu0
      %v767 = vadd.f32 0.0, %v766
      %v768 = vpop.f32.mrf.mxu0
      %769 = vmatprep.mubr.f32.mxu0 0.0
      %770 = vmatmul.mubr.f32.gmra.mxu0 %v641
      %v771 = vpop.f32.mrf.mxu0
      %v772 = vadd.f32 0.0, %v771
      %v773 = vpop.f32.mrf.mxu0
      %774 = vmatprep.mubr.f32.mxu0 0.0
      %775 = vmatmul.mubr.f32.gmra.mxu0 %v644
      %v776 = vpop.f32.mrf.mxu0
      %v777 = vadd.f32 0.0, %v776
      %v778 = vpop.f32.mrf.mxu0
      %779 = vmatprep.mubr.f32.mxu0 0.0
      %780 = vmatmul.mubr.f32.gmra.mxu0 %v647
      %v781 = vpop.f32.mrf.mxu0
      %v782 = vadd.f32 0.0, %v781
      %v783 = vpop.f32.mrf.mxu0
      %784 = vmatprep.mubr.f32.mxu0 0.0
      %785 = vmatmul.mubr.f32.gmra.mxu0 %v650
      %v786 = vpop.f32.mrf.mxu0
      %v787 = vadd.f32 0.0, %v786
      %v788 = vpop.f32.mrf.mxu0
      %789 = vmatprep.mubr.f32.mxu0 0.0
      %790 = vmatmul.mubr.f32.gmra.mxu0 %v653
      %v791 = vpop.f32.mrf.mxu0
      %v792 = vadd.f32 0.0, %v791
      %v793 = vpop.f32.mrf.mxu0
      %794 = vmatprep.mubr.f32.mxu0 0.0
      %795 = vmatmul.mubr.f32.gmra.mxu0 %v656
      %v796 = vpop.f32.mrf.mxu0
      %v797 = vadd.f32 0.0, %v796
      %v798 = vpop.f32.mrf.mxu0
      %799 = vmatprep.mubr.f32.mxu0 0.0
      %800 = vmatmul.mubr.f32.gmra.mxu0 %v659
      %v801 = vpop.f32.mrf.mxu0
      %v802 = vadd.f32 0.0, %v801
      %v803 = vpop.f32.mrf.mxu0
      %804 = vmatprep.mubr.f32.mxu0 0.0
      %805 = vmatmul.mubr.f32.gmra.mxu0 %v662
      %v806 = vpop.f32.mrf.mxu0
      %v807 = vadd.f32 0.0, %v806
      %v808 = vpop.f32.mrf.mxu0
      %809 = vmatprep.mubr.f32.mxu0 0.0
      %810 = vmatmul.mubr.f32.gmra.mxu0 %v665
      %v811 = vpop.f32.mrf.mxu0
      %v812 = vadd.f32 0.0, %v811
      %v813 = vpop.f32.mrf.mxu0
      %814 = vdwg.mxu0
      %v815 = vadd.f32 %v522, %v737
      %v816 = vadd.f32 %v527, %v742
      %v817 = vadd.f32 %v532, %v747
      %v818 = vadd.f32 %v537, %v752
      %v819 = vadd.f32 %v542, %v757
      %v820 = vadd.f32 %v547, %v762
      %v821 = vadd.f32 %v552, %v767
      %v822 = vadd.f32 %v557, %v772
      %v823 = vadd.f32 %v562, %v777
      %v824 = vadd.f32 %v567, %v782
      %v825 = vadd.f32 %v572, %v787
      %v826 = vadd.f32 %v577, %v792
      %v827 = vadd.f32 %v582, %v797
      %v828 = vadd.f32 %v587, %v802
      %v829 = vadd.f32 %v592, %v807
      %v830 = vadd.f32 %v597, %v812
      %v831 = vld [vmem:[%s214] sm:$0x1]
      %v832 = vlaneseq
      %v833 = vshrl.u32 %v832, 7
      %v834 = vsub.s32 0, %v833
      %v835 = vrot.slane %v831, %v834
      %v836 = vmul.f32 %v815, %v835
      %v837 = vmul.f32 %v816, %v835
      %v838 = vmul.f32 %v817, %v835
      %v839 = vmul.f32 %v818, %v835
      %v840 = vmul.f32 %v819, %v835
      %v841 = vmul.f32 %v820, %v835
      %v842 = vmul.f32 %v821, %v835
      %v843 = vmul.f32 %v822, %v835
      %v844 = vmul.f32 %v823, %v835
      %v845 = vmul.f32 %v824, %v835
      %v846 = vmul.f32 %v825, %v835
      %v847 = vmul.f32 %v826, %v835
      %v848 = vmul.f32 %v827, %v835
      %v849 = vmul.f32 %v828, %v835
      %v850 = vmul.f32 %v829, %v835
      %v851 = vmul.f32 %v830, %v835
      %v852 = vld [vmem:[%s214 + $0x1] sm:$0x1]
      %v853 = vlaneseq
      %v854 = vshrl.u32 %v853, 7
      %v855 = vsub.s32 0, %v854
      %v856 = vrot.slane %v852, %v855
      %v857 = vadd.f32 %v836, %v856
      %v858 = vadd.f32 %v837, %v856
      %v859 = vadd.f32 %v838, %v856
      %v860 = vadd.f32 %v839, %v856
      %v861 = vadd.f32 %v840, %v856
      %v862 = vadd.f32 %v841, %v856
      %v863 = vadd.f32 %v842, %v856
      %v864 = vadd.f32 %v843, %v856
      %v865 = vadd.f32 %v844, %v856
      %v866 = vadd.f32 %v845, %v856
      %v867 = vadd.f32 %v846, %v856
      %v868 = vadd.f32 %v847, %v856
      %v869 = vadd.f32 %v848, %v856
      %v870 = vadd.f32 %v849, %v856
      %v871 = vadd.f32 %v850, %v856
      %v872 = vadd.f32 %v851, %v856
      %vm873 = vcmp.ge.f32.partialorder %v857, 0.0
      %vm874 = vcmp.ge.f32.partialorder %v858, 0.0
      %vm875 = vcmp.ge.f32.partialorder %v859, 0.0
      %vm876 = vcmp.ge.f32.partialorder %v860, 0.0
      %vm877 = vcmp.ge.f32.partialorder %v861, 0.0
      %vm878 = vcmp.ge.f32.partialorder %v862, 0.0
      %vm879 = vcmp.ge.f32.partialorder %v863, 0.0
      %vm880 = vcmp.ge.f32.partialorder %v864, 0.0
      %vm881 = vcmp.ge.f32.partialorder %v865, 0.0
      %vm882 = vcmp.ge.f32.partialorder %v866, 0.0
      %vm883 = vcmp.ge.f32.partialorder %v867, 0.0
      %vm884 = vcmp.ge.f32.partialorder %v868, 0.0
      %vm885 = vcmp.ge.f32.partialorder %v869, 0.0
      %vm886 = vcmp.ge.f32.partialorder %v870, 0.0
      %vm887 = vcmp.ge.f32.partialorder %v871, 0.0
      %vm888 = vcmp.ge.f32.partialorder %v872, 0.0
      %v889 = vmul.f32 %v857, 0.2
      %v890 = vmul.f32 %v858, 0.2
      %v891 = vmul.f32 %v859, 0.2
      %v892 = vmul.f32 %v860, 0.2
      %v893 = vmul.f32 %v861, 0.2
      %v894 = vmul.f32 %v862, 0.2
      %v895 = vmul.f32 %v863, 0.2
      %v896 = vmul.f32 %v864, 0.2
      %v897 = vmul.f32 %v865, 0.2
      %v898 = vmul.f32 %v866, 0.2
      %v899 = vmul.f32 %v867, 0.2
      %v900 = vmul.f32 %v868, 0.2
      %v901 = vmul.f32 %v869, 0.2
      %v902 = vmul.f32 %v870, 0.2
      %v903 = vmul.f32 %v871, 0.2
      %v904 = vmul.f32 %v872, 0.2
      %v905 = vsel %vm873, %v857, %v889
      %v906 = vsel %vm874, %v858, %v890
      %v907 = vsel %vm875, %v859, %v891
      %v908 = vsel %vm876, %v860, %v892
      %v909 = vsel %vm877, %v861, %v893
      %v910 = vsel %vm878, %v862, %v894
      %v911 = vsel %vm879, %v863, %v895
      %v912 = vsel %vm880, %v864, %v896
      %v913 = vsel %vm881, %v865, %v897
      %v914 = vsel %vm882, %v866, %v898
      %v915 = vsel %vm883, %v867, %v899
      %v916 = vsel %vm884, %v868, %v900
      %v917 = vsel %vm885, %v869, %v901
      %v918 = vsel %vm886, %v870, %v902
      %v919 = vsel %vm887, %v871, %v903
      %v920 = vsel %vm888, %v872, %v904
      %v921 = vmul.f32 %v905, 1.4142135
      %v922 = vmul.f32 %v906, 1.4142135
      %v923 = vmul.f32 %v907, 1.4142135
      %v924 = vmul.f32 %v908, 1.4142135
      %v925 = vmul.f32 %v909, 1.4142135
      %v926 = vmul.f32 %v910, 1.4142135
      %v927 = vmul.f32 %v911, 1.4142135
      %v928 = vmul.f32 %v912, 1.4142135
      %v929 = vmul.f32 %v913, 1.4142135
      %v930 = vmul.f32 %v914, 1.4142135
      %v931 = vmul.f32 %v915, 1.4142135
      %v932 = vmul.f32 %v916, 1.4142135
      %v933 = vmul.f32 %v917, 1.4142135
      %v934 = vmul.f32 %v918, 1.4142135
      %v935 = vmul.f32 %v919, 1.4142135
      %v936 = vmul.f32 %v920, 1.4142135
      %937 = vst [vmem:[%s223] sm:$0xff] %v921
      %938 = vst [vmem:[%s223 + $0x8] sm:$0xff] %v922
      %939 = vst [vmem:[%s223 + $0x10] sm:$0xff] %v923
      %940 = vst [vmem:[%s223 + $0x18] sm:$0xff] %v924
      %941 = vst [vmem:[%s223 + $0x20] sm:$0xff] %v925
      %942 = vst [vmem:[%s223 + $0x28] sm:$0xff] %v926
      %943 = vst [vmem:[%s223 + $0x30] sm:$0xff] %v927
      %944 = vst [vmem:[%s223 + $0x38] sm:$0xff] %v928
      %945 = vst [vmem:[%s223 + $0x40] sm:$0xff] %v929
      %946 = vst [vmem:[%s223 + $0x48] sm:$0xff] %v930
      %947 = vst [vmem:[%s223 + $0x50] sm:$0xff] %v931
      %948 = vst [vmem:[%s223 + $0x58] sm:$0xff] %v932
      %949 = vst [vmem:[%s223 + $0x60] sm:$0xff] %v933
      %950 = vst [vmem:[%s223 + $0x68] sm:$0xff] %v934
      %951 = vst [vmem:[%s223 + $0x70] sm:$0xff] %v935
      %952 = vst [vmem:[%s223 + $0x78] sm:$0xff] %v936
      %s953 = smul.u32 16, %s19
      %p954 = scmp.lt.s32.totalorder %s18, 1
      %s955 = scalar_select %p954, %s18, 1
      %p956 = scmp.lt.s32.totalorder %s953, 31
      %s957 = scalar_select %p956, %s953, 31
      %s958 = smul.addr %s955, 32
      %s959 = sadd.s32 %s957, %s958
      %s960 = smul.addr %s959, 8
      %s961 = scalar_lea.vmem %s3, %s960
      // Predicated region
      $region33: #{styled_f_conv_block.2} parent=31 // pred_check
        %p962 = pneg %p121
      $region34: #{styled_f_conv_block.2} parent=31 // pred_check_branch
        %964 = sbr.rel (%p962) target = $region36
      $region35: #{styled_f_conv_block.2} parent=31 // pred_region
        %s965 = smul.u32 16, %s19
      $region36: #{styled_f_conv_block.2} parent=31 // pred_fallthru
        _
    $region32: #{styled_f_conv_block.2} parent=5 // pred_fallthru
      _
    %p966 = scmp.le.s32.totalorder 2, %s9
    // Predicated region
    $region37: #{styled_f_conv_block.2} parent=5 // pred_check
      %p967 = pneg %p966
    $region38: #{styled_f_conv_block.2} parent=5 // pred_check_branch
      %969 = sbr.rel (%p967) target = $region40
    $region39: #{styled_f_conv_block.2} parent=5 // pred_region
      %s970 = ssub.s32 %s9, 2
      // Predicated region
      $region41: #{styled_f_conv_block.2} parent=39 // pred_check
        %p971 = pneg %p127
      $region42: #{styled_f_conv_block.2} parent=39 // pred_check_branch
        %973 = sbr.rel (%p971) target = $region44
      $region43: #{styled_f_conv_block.2} parent=39 // pred_region
        %s974 = smul.u32 16, %s21
        %p975 = scmp.lt.s32.totalorder %s20, 1
        %s976 = scalar_select %p975, %s20, 1
        %p977 = scmp.lt.s32.totalorder %s974, 31
        %s978 = scalar_select %p977, %s974, 31
        %s979 = smul.addr %s976, 32
        %s980 = sadd.s32 %s978, %s979
        %s981 = smul.addr %s980, 8
        %s982 = scalar_lea.vmem %s3, %s981
      $region44: #{styled_f_conv_block.2} parent=39 // pred_fallthru
        _
    $region40: #{styled_f_conv_block.2} parent=5 // pred_fallthru
      _
  $region6: #{styled_f_conv_block.2} parent=0 // loop_footer
    %s13 = sadd.s32 1, %s9
  $region7: #{styled_f_conv_block.2} parent=0 // loop_footer_branch
    %8 = sbr.rel target = $region3
  $region8: #{styled_f_conv_block.2} parent=0 // loop_exit
    _

// kernel: styled_f_conv_block.3
$region0: #{styled_f_conv_block.3}
  #allocation0 [shape = 'u32[]', space=smem, size = 0x4, offset = 0x4, fixed_abs, tag = 'smem constant byte address 0x4 - core index']
  #allocation1 [shape = 'u32[144,128]{1,0:T(1,128)}', space=vmem, size = 0x12000, scoped, tag = 'internal scratch']
  %s0 = inlined_call_operand.vmem [shape: f32[2,2,160,384], index: 0, kind: input, shape index: {}]
  %s1 = inlined_call_operand.vmem [shape: f32[3,384,128], index: 1, kind: input, shape index: {}]
  %s2 = inlined_call_operand.vmem [shape: f32[2,2,128], index: 2, kind: input, shape index: {}]
  %s3 = inlined_call_operand.vmem [shape: f32[2,256,128], index: 3, kind: output, shape index: {}]
  %s4 = sld [smem:[#allocation0]]
  $region45: #{styled_f_conv_block.3} parent=0
    _
  %s6 = ssub.s32 1, %s4
  %s7 = scalar_select 0, %s6, %s4
  loop: start=0, step=1, limit=6
  $region2: #{styled_f_conv_block.3} parent=0 // loop_pre_header
    _
  $region3: #{styled_f_conv_block.3} parent=0 // loop_header
    %s9 = sphi 0, %s13
    %p10 = scmp.ge.s32.totalorder %s9, 6
    %s16 = sphi 0, %s28
    %s17 = sphi 0, %s24
    %s18 = sphi 0, %s16
    %s19 = sphi 0, %s17
    %s20 = sphi 0, %s18
    %s21 = sphi 0, %s19
    %s33 = sphi 0, %s35
    %s36 = sphi 0, %s33
    %s37 = sphi 0, %s36
    %s53 = sphi 0, %s37
    %s57 = sphi 0, %s57
    %s59 = sphi 0, %s57
    %s60 = sphi 0, %s59
    %s74 = sphi 0, %s60
    %s80 = sphi 0, %s82
    %s83 = sphi 0, %s80
    %s84 = sphi 0, %s83
    %s100 = sphi 0, %s84
    %s108 = sphi 0, %s110
    %s111 = sphi 0, %s108
    %s112 = sphi 0, %s111
    %s128 = sphi 0, %s112
  $region4: #{styled_f_conv_block.3} parent=0 // loop_header_branch
    %12 = sbr.rel (%p10) target = $region8
  $region5: #{styled_f_conv_block.3} parent=0 // loop_body
    %s14 = ssub.s32 %s9, 1
    %s15 = ssub.s32 %s9, 2
    %s22 = sadd.s32 1, %s17
    %p23 = scmp.ge.s32.totalorder %s22, 2
    %s24 = scalar_select %p23, 0, %s22
    %s25 = sadd.s32 1, %s16
    %s26 = scalar_select %p23, %s25, %s16
    %p27 = scmp.ge.s32.totalorder %s26, 2
    %s28 = scalar_select %p27, 0, %s26
    %s29 = ssub.s32 %s16, %s28
    %s30 = ssub.s32 %s17, %s24
    %s31 = sor.u32 %s29, %s30
    %p32 = scmp.eq.s32.totalorder %s31, 0
    %s34 = sadd.s32 %s33, 1
    %s35 = scalar_select %p32, %s33, %s34
    %p38 = pneg %p32
    %p39 = scmp.eq.s32.totalorder %s9, 3
    %p40 = por %p38, %p39
    %p41 = scmp.ne.s32.totalorder %s33, %s36
    %p42 = scmp.eq.s32.totalorder %s9, 0
    %p43 = por %p41, %p42
    %p44 = scmp.ne.s32.totalorder %s33, %s36
    %p45 = scmp.eq.s32.totalorder %s14, 3
    %p46 = por %p44, %p45
    %p47 = scmp.ne.s32.totalorder %s36, %s37
    %p48 = scmp.eq.s32.totalorder %s14, 0
    %p49 = por %p47, %p48
    %p50 = scmp.ne.s32.totalorder %s36, %s37
    %p51 = scmp.eq.s32.totalorder %s15, 3
    %p52 = por %p50, %p51
    %p54 = scmp.ne.s32.totalorder %s37, %s53
    %p55 = scmp.eq.s32.totalorder %s15, 0
    %p56 = por %p54, %p55
    %s58 = sadd.s32 %s57, 1
    %p61 = scmp.eq.s32.totalorder %s9, 3
    %p62 = scmp.ne.s32.totalorder %s57, %s59
    %p63 = scmp.eq.s32.totalorder %s9, 0
    %p64 = por %p62, %p63
    %p65 = scmp.ne.s32.totalorder %s57, %s59
    %p66 = scmp.eq.s32.totalorder %s14, 3
    %p67 = por %p65, %p66
    %p68 = scmp.ne.s32.totalorder %s59, %s60
    %p69 = scmp.eq.s32.totalorder %s14, 0
    %p70 = por %p68, %p69
    %p71 = scmp.ne.s32.totalorder %s59, %s60
    %p72 = scmp.eq.s32.totalorder %s15, 3
    %p73 = por %p71, %p72
    %p75 = scmp.ne.s32.totalorder %s60, %s74
    %p76 = scmp.eq.s32.totalorder %s15, 0
    %p77 = por %p75, %p76
    %s78 = ssub.s32 %s16, %s28
    %p79 = scmp.eq.s32.totalorder %s78, 0
    %s81 = sadd.s32 %s80, 1
    %s82 = scalar_select %p79, %s80, %s81
    %p85 = pneg %p79
    %p86 = scmp.eq.s32.totalorder %s9, 3
    %p87 = por %p85, %p86
    %p88 = scmp.ne.s32.totalorder %s80, %s83
    %p89 = scmp.eq.s32.totalorder %s9, 0
    %p90 = por %p88, %p89
    %p91 = scmp.ne.s32.totalorder %s80, %s83
    %p92 = scmp.eq.s32.totalorder %s14, 3
    %p93 = por %p91, %p92
    %p94 = scmp.ne.s32.totalorder %s83, %s84
    %p95 = scmp.eq.s32.totalorder %s14, 0
    %p96 = por %p94, %p95
    %p97 = scmp.ne.s32.totalorder %s83, %s84
    %p98 = scmp.eq.s32.totalorder %s15, 3
    %p99 = por %p97, %p98
    %p101 = scmp.ne.s32.totalorder %s84, %s100
    %p102 = scmp.eq.s32.totalorder %s15, 0
    %p103 = por %p101, %p102
    %s104 = ssub.s32 %s16, %s28
    %s105 = ssub.s32 %s17, %s24
    %s106 = sor.u32 %s104, %s105
    %p107 = scmp.eq.s32.totalorder %s106, 0
    %s109 = sadd.s32 %s108, 1
    %s110 = scalar_select %p107, %s108, %s109
    %p113 = pneg %p107
    %p114 = scmp.eq.s32.totalorder %s9, 3
    %p115 = por %p113, %p114
    %p116 = scmp.ne.s32.totalorder %s108, %s111
    %p117 = scmp.eq.s32.totalorder %s9, 0
    %p118 = por %p116, %p117
    %p119 = scmp.ne.s32.totalorder %s108, %s111
    %p120 = scmp.eq.s32.totalorder %s14, 3
    %p121 = por %p119, %p120
    %p122 = scmp.ne.s32.totalorder %s111, %s112
    %p123 = scmp.eq.s32.totalorder %s14, 0
    %p124 = por %p122, %p123
    %p125 = scmp.ne.s32.totalorder %s111, %s112
    %p126 = scmp.eq.s32.totalorder %s15, 3
    %p127 = por %p125, %p126
    %p129 = scmp.ne.s32.totalorder %s112, %s128
    %p130 = scmp.eq.s32.totalorder %s15, 0
    %p131 = por %p129, %p130
    %p132 = scmp.le.s32.totalorder 1, %s9
    %p133 = scmp.lt.s32.totalorder %s9, 5
    %p134 = pnand %p132, %p133
    %p135 = pneg %p134
    // Predicated region
    $region9: #{styled_f_conv_block.3} parent=5 // pred_check
      _
    $region10: #{styled_f_conv_block.3} parent=5 // pred_check_branch
      %137 = sbr.rel (%p134) target = $region12
    $region11: #{styled_f_conv_block.3} parent=5 // pred_region
      %s138 = ssub.s32 %s9, 1
      // Predicated region
      $region13: #{styled_f_conv_block.3} parent=11 // pred_check
        %p139 = pneg %p70
      $region14: #{styled_f_conv_block.3} parent=11 // pred_check_branch
        %141 = sbr.rel (%p139) target = $region16
      $region15: #{styled_f_conv_block.3} parent=11 // pred_region
        _
      $region16: #{styled_f_conv_block.3} parent=11 // pred_fallthru
        _
    $region12: #{styled_f_conv_block.3} parent=5 // pred_fallthru
      _
    %p142 = scmp.lt.s32.totalorder %s9, 4
    // Predicated region
    $region17: #{styled_f_conv_block.3} parent=5 // pred_check
      %p143 = pneg %p142
    $region18: #{styled_f_conv_block.3} parent=5 // pred_check_branch
      %145 = sbr.rel (%p143) target = $region20
    $region19: #{styled_f_conv_block.3} parent=5 // pred_region
      // Predicated region
      $region21: #{styled_f_conv_block.3} parent=19 // pred_check
        %p146 = pneg %p43
      $region22: #{styled_f_conv_block.3} parent=19 // pred_check_branch
        %148 = sbr.rel (%p146) target = $region24
      $region23: #{styled_f_conv_block.3} parent=19 // pred_region
        %p149 = scmp.lt.s32.totalorder %s16, 1
        %s150 = scalar_select %p149, %s16, 1
        %p151 = scmp.lt.s32.totalorder %s17, 1
        %s152 = scalar_select %p151, %s17, 1
        %s153 = smul.addr %s152, 60
        %s154 = smul.addr %s150, 120
        %s155 = sadd.s32 %s153, %s154
        %s156 = smul.addr %s155, 8
        %s157 = scalar_lea.vmem %s0, %s156
      $region24: #{styled_f_conv_block.3} parent=19 // pred_fallthru
        _
      // Predicated region
      $region25: #{styled_f_conv_block.3} parent=19 // pred_check
        %p158 = pneg %p90
      $region26: #{styled_f_conv_block.3} parent=19 // pred_check_branch
        %160 = sbr.rel (%p158) target = $region28
      $region27: #{styled_f_conv_block.3} parent=19 // pred_region
        %p161 = scmp.lt.s32.totalorder %s16, 1
        %s162 = scalar_select %p161, %s16, 1
        %s163 = smul.addr %s162, 2
        %s164 = scalar_lea.vmem %s2, %s163
      $region28: #{styled_f_conv_block.3} parent=19 // pred_fallthru
        _
    $region20: #{styled_f_conv_block.3} parent=5 // pred_fallthru
      _
    %p165 = scmp.le.s32.totalorder 1, %s9
    %p166 = scmp.lt.s32.totalorder %s9, 5
    %p167 = pnand %p165, %p166
    %p168 = pneg %p167
    // Predicated region
    $region29: #{styled_f_conv_block.3} parent=5 // pred_check
      _
    $region30: #{styled_f_conv_block.3} parent=5 // pred_check_branch
      %170 = sbr.rel (%p167) target = $region32
    $region31: #{styled_f_conv_block.3} parent=5 // pred_region
      %s171 = ssub.s32 %s9, 1
      %p172 = scmp.lt.s32.totalorder %s18, 1
      %s173 = scalar_select %p172, %s18, 1
      %p174 = scmp.lt.s32.totalorder %s19, 1
      %s175 = scalar_select %p174, %s19, 1
      %s176 = smul.addr %s175, 60
      %s177 = smul.addr %s173, 120
      %s178 = sadd.s32 %s176, %s177
      %s179 = smul.addr %s178, 8
      %s180 = scalar_lea.vmem %s0, %s179
      %p181 = pneg %p49
      %p182 = pneg %p46
      %p183 = pneg %p70
      %p184 = pneg %p67
      %p185 = scmp.lt.s32.totalorder %s18, 1
      %s186 = scalar_select %p185, %s18, 1
      %s187 = smul.addr %s186, 2
      %s188 = scalar_lea.vmem %s2, %s187
      %p189 = pneg %p96
      %p190 = pneg %p93
      %p191 = pneg %p124
      %p192 = pneg %p121
      %s193 = smul.u32 16, %s19
      %p194 = scmp.lt.s32.totalorder %s18, 1
      %s195 = scalar_select %p194, %s18, 1
      %p196 = scmp.lt.s32.totalorder %s193, 31
      %s197 = scalar_select %p196, %s193, 31
      %s198 = smul.addr %s195, 32
      %s199 = sadd.s32 %s197, %s198
      %s200 = smul.addr %s199, 8
      %s201 = scalar_lea.vmem %s3, %s200
      %p202 = scmp.lt.s32.totalorder %s18, 1
      %s203 = scalar_select %p202, %s18, 1
      %p204 = scmp.lt.s32.totalorder %s19, 1
      %s205 = scalar_select %p204, %s19, 1
      %s206 = smul.addr %s205, 60
      %s207 = smul.addr %s203, 120
      %s208 = sadd.s32 %s206, %s207
      %s209 = smul.addr %s208, 8
      %s210 = scalar_lea.vmem %s0, %s209
      %p211 = scmp.lt.s32.totalorder %s18, 1
      %s212 = scalar_select %p211, %s18, 1
      %s213 = smul.addr %s212, 2
      %s214 = scalar_lea.vmem %s2, %s213
      %s215 = smul.u32 16, %s19
      %p216 = scmp.lt.s32.totalorder %s18, 1
      %s217 = scalar_select %p216, %s18, 1
      %p218 = scmp.lt.s32.totalorder %s215, 31
      %s219 = scalar_select %p218, %s215, 31
      %s220 = smul.addr %s217, 32
      %s221 = sadd.s32 %s219, %s220
      %s222 = smul.addr %s221, 8
      %s223 = scalar_lea.vmem %s3, %s222
      %s224 = smul.u32 16, %s19
      %v225 = vld [vmem:[%s210] sm:$0xff]
      %v226 = vld [vmem:[%s210 + $0x8] sm:$0xff]
      %v227 = vld [vmem:[%s210 + $0x10] sm:$0xff]
      %v228 = vld [vmem:[%s210 + $0x18] sm:$0xff]
      %v229 = vld [vmem:[%s210 + $0x20] sm:$0xff]
      %v230 = vld [vmem:[%s210 + $0x28] sm:$0xff]
      %v231 = vld [vmem:[%s210 + $0x30] sm:$0xff]
      %v232 = vld [vmem:[%s210 + $0x38] sm:$0xff]
      %v233 = vld [vmem:[%s210 + $0x40] sm:$0xff]
      %v234 = vld [vmem:[%s210 + $0x48] sm:$0xff]
      %v235 = vld [vmem:[%s210 + $0x50] sm:$0xff]
      %v236 = vld [vmem:[%s210 + $0x58] sm:$0xff]
      %v237 = vld [vmem:[%s210 + $0x60] sm:$0xff]
      %v238 = vld [vmem:[%s210 + $0x68] sm:$0xff]
      %v239 = vld [vmem:[%s210 + $0x70] sm:$0xff]
      %v240 = vld [vmem:[%s210 + $0x78] sm:$0xff]
      %v241 = vld [vmem:[%s210 + $0x80] sm:$0xff]
      %v242 = vld [vmem:[%s210 + $0x88] sm:$0xff]
      %v243 = vld [vmem:[%s210 + $0x90] sm:$0xff]
      %v244 = vld [vmem:[%s210 + $0x98] sm:$0xff]
      %v245 = vld [vmem:[%s210 + $0xa0] sm:$0xff]
      %v246 = vld [vmem:[%s210 + $0xa8] sm:$0xff]
      %v247 = vld [vmem:[%s210 + $0xb0] sm:$0xff]
      %v248 = vld [vmem:[%s210 + $0xb8] sm:$0xff]
      %v249 = vld [vmem:[%s210 + $0xc0] sm:$0xff]
      %v250 = vld [vmem:[%s210 + $0xc8] sm:$0xff]
      %v251 = vld [vmem:[%s210 + $0xd0] sm:$0xff]
      %v252 = vld [vmem:[%s210 + $0xd8] sm:$0xff]
      %v253 = vld [vmem:[%s210 + $0xe0] sm:$0xff]
      %v254 = vld [vmem:[%s210 + $0xe8] sm:$0xff]
      %v255 = vld [vmem:[%s210 + $0xf0] sm:$0xff]
      %v256 = vld [vmem:[%s210 + $0xf8] sm:$0xff]
      %v257 = vld [vmem:[%s210 + $0x100] sm:$0xff]
      %v258 = vld [vmem:[%s210 + $0x108] sm:$0xff]
      %v259 = vld [vmem:[%s210 + $0x110] sm:$0xff]
      %v260 = vld [vmem:[%s210 + $0x118] sm:$0xff]
      %v261 = vld [vmem:[%s210 + $0x120] sm:$0xff]
      %v262 = vld [vmem:[%s210 + $0x128] sm:$0xff]
      %v263 = vld [vmem:[%s210 + $0x130] sm:$0xff]
      %v264 = vld [vmem:[%s210 + $0x138] sm:$0xff]
      %v265 = vld [vmem:[%s210 + $0x140] sm:$0xff]
      %v266 = vld [vmem:[%s210 + $0x148] sm:$0xff]
      %v267 = vld [vmem:[%s210 + $0x150] sm:$0xff]
      %v268 = vld [vmem:[%s210 + $0x158] sm:$0xff]
      %v269 = vld [vmem:[%s210 + $0x160] sm:$0xff]
      %v270 = vld [vmem:[%s210 + $0x168] sm:$0xff]
      %v271 = vld [vmem:[%s210 + $0x170] sm:$0xff]
      %v272 = vld [vmem:[%s210 + $0x178] sm:$0xff]
      %v273 = vld [vmem:[%s1] sm:$0xff]
      %v274 = vld [vmem:[%s1 + $0x8] sm:$0xff]
      %v275 = vld [vmem:[%s1 + $0x10] sm:$0xff]
      %v276 = vld [vmem:[%s1 + $0x18] sm:$0xff]
      %v277 = vld [vmem:[%s1 + $0x20] sm:$0xff]
      %v278 = vld [vmem:[%s1 + $0x28] sm:$0xff]
      %v279 = vld [vmem:[%s1 + $0x30] sm:$0xff]
      %v280 = vld [vmem:[%s1 + $0x38] sm:$0xff]
      %v281 = vld [vmem:[%s1 + $0x40] sm:$0xff]
      %v282 = vld [vmem:[%s1 + $0x48] sm:$0xff]
      %v283 = vld [vmem:[%s1 + $0x50] sm:$0xff]
      %v284 = vld [vmem:[%s1 + $0x58] sm:$0xff]
      %v285 = vld [vmem:[%s1 + $0x60] sm:$0xff]
      %v286 = vld [vmem:[%s1 + $0x68] sm:$0xff]
      %v287 = vld [vmem:[%s1 + $0x70] sm:$0xff]
      %v288 = vld [vmem:[%s1 + $0x78] sm:$0xff]
      %v289 = vld [vmem:[%s1 + $0x80] sm:$0xff]
      %v290 = vld [vmem:[%s1 + $0x88] sm:$0xff]
      %v291 = vld [vmem:[%s1 + $0x90] sm:$0xff]
      %v292 = vld [vmem:[%s1 + $0x98] sm:$0xff]
      %v293 = vld [vmem:[%s1 + $0xa0] sm:$0xff]
      %v294 = vld [vmem:[%s1 + $0xa8] sm:$0xff]
      %v295 = vld [vmem:[%s1 + $0xb0] sm:$0xff]
      %v296 = vld [vmem:[%s1 + $0xb8] sm:$0xff]
      %v297 = vld [vmem:[%s1 + $0xc0] sm:$0xff]
      %v298 = vld [vmem:[%s1 + $0xc8] sm:$0xff]
      %v299 = vld [vmem:[%s1 + $0xd0] sm:$0xff]
      %v300 = vld [vmem:[%s1 + $0xd8] sm:$0xff]
      %v301 = vld [vmem:[%s1 + $0xe0] sm:$0xff]
      %v302 = vld [vmem:[%s1 + $0xe8] sm:$0xff]
      %v303 = vld [vmem:[%s1 + $0xf0] sm:$0xff]
      %v304 = vld [vmem:[%s1 + $0xf8] sm:$0xff]
      %v305 = vld [vmem:[%s1 + $0x100] sm:$0xff]
      %v306 = vld [vmem:[%s1 + $0x108] sm:$0xff]
      %v307 = vld [vmem:[%s1 + $0x110] sm:$0xff]
      %v308 = vld [vmem:[%s1 + $0x118] sm:$0xff]
      %v309 = vld [vmem:[%s1 + $0x120] sm:$0xff]
      %v310 = vld [vmem:[%s1 + $0x128] sm:$0xff]
      %v311 = vld [vmem:[%s1 + $0x130] sm:$0xff]
      %v312 = vld [vmem:[%s1 + $0x138] sm:$0xff]
      %v313 = vld [vmem:[%s1 + $0x140] sm:$0xff]
      %v314 = vld [vmem:[%s1 + $0x148] sm:$0xff]
      %v315 = vld [vmem:[%s1 + $0x150] sm:$0xff]
      %v316 = vld [vmem:[%s1 + $0x158] sm:$0xff]
      %v317 = vld [vmem:[%s1 + $0x160] sm:$0xff]
      %v318 = vld [vmem:[%s1 + $0x168] sm:$0xff]
      %v319 = vld [vmem:[%s1 + $0x170] sm:$0xff]
      %v320 = vld [vmem:[%s1 + $0x178] sm:$0xff]
      %v321 = vld [vmem:[%s210 + $0x180] sm:$0xff]
      %v322 = vld [vmem:[%s210 + $0x188] sm:$0xff]
      %v323 = vld [vmem:[%s210 + $0x190] sm:$0xff]
      %v324 = vld [vmem:[%s210 + $0x198] sm:$0xff]
      %v325 = vld [vmem:[%s210 + $0x1a0] sm:$0xff]
      %v326 = vld [vmem:[%s210 + $0x1a8] sm:$0xff]
      %s327 = scalar_lea.vmem %s1, 384
      %v328 = vld [vmem:[%s327] sm:$0xff]
      %v329 = vld [vmem:[%s327 + $0x8] sm:$0xff]
      %v330 = vld [vmem:[%s327 + $0x10] sm:$0xff]
      %v331 = vld [vmem:[%s327 + $0x18] sm:$0xff]
      %v332 = vld [vmem:[%s327 + $0x20] sm:$0xff]
      %v333 = vld [vmem:[%s327 + $0x28] sm:$0xff]
      %v334 = vld [vmem:[%s327 + $0x30] sm:$0xff]
      %v335 = vld [vmem:[%s327 + $0x38] sm:$0xff]
      %v336 = vld [vmem:[%s327 + $0x40] sm:$0xff]
      %v337 = vld [vmem:[%s327 + $0x48] sm:$0xff]
      %v338 = vld [vmem:[%s327 + $0x50] sm:$0xff]
      %v339 = vld [vmem:[%s327 + $0x58] sm:$0xff]
      %v340 = vld [vmem:[%s327 + $0x60] sm:$0xff]
      %v341 = vld [vmem:[%s327 + $0x68] sm:$0xff]
      %v342 = vld [vmem:[%s327 + $0x70] sm:$0xff]
      %v343 = vld [vmem:[%s327 + $0x78] sm:$0xff]
      %v344 = vld [vmem:[%s327 + $0x80] sm:$0xff]
      %v345 = vld [vmem:[%s327 + $0x88] sm:$0xff]
      %v346 = vld [vmem:[%s327 + $0x90] sm:$0xff]
      %v347 = vld [vmem:[%s327 + $0x98] sm:$0xff]
      %v348 = vld [vmem:[%s327 + $0xa0] sm:$0xff]
      %v349 = vld [vmem:[%s327 + $0xa8] sm:$0xff]
      %v350 = vld [vmem:[%s327 + $0xb0] sm:$0xff]
      %v351 = vld [vmem:[%s327 + $0xb8] sm:$0xff]
      %v352 = vld [vmem:[%s327 + $0xc0] sm:$0xff]
      %v353 = vld [vmem:[%s327 + $0xc8] sm:$0xff]
      %v354 = vld [vmem:[%s327 + $0xd0] sm:$0xff]
      %v355 = vld [vmem:[%s327 + $0xd8] sm:$0xff]
      %v356 = vld [vmem:[%s327 + $0xe0] sm:$0xff]
      %v357 = vld [vmem:[%s327 + $0xe8] sm:$0xff]
      %v358 = vld [vmem:[%s327 + $0xf0] sm:$0xff]
      %v359 = vld [vmem:[%s327 + $0xf8] sm:$0xff]
      %v360 = vld [vmem:[%s327 + $0x100] sm:$0xff]
      %v361 = vld [vmem:[%s327 + $0x108] sm:$0xff]
      %v362 = vld [vmem:[%s327 + $0x110] sm:$0xff]
      %v363 = vld [vmem:[%s327 + $0x118] sm:$0xff]
      %v364 = vld [vmem:[%s327 + $0x120] sm:$0xff]
      %v365 = vld [vmem:[%s327 + $0x128] sm:$0xff]
      %v366 = vld [vmem:[%s327 + $0x130] sm:$0xff]
      %v367 = vld [vmem:[%s327 + $0x138] sm:$0xff]
      %v368 = vld [vmem:[%s327 + $0x140] sm:$0xff]
      %v369 = vld [vmem:[%s327 + $0x148] sm:$0xff]
      %v370 = vld [vmem:[%s327 + $0x150] sm:$0xff]
      %v371 = vld [vmem:[%s327 + $0x158] sm:$0xff]
      %v372 = vld [vmem:[%s327 + $0x160] sm:$0xff]
      %v373 = vld [vmem:[%s327 + $0x168] sm:$0xff]
      %v374 = vld [vmem:[%s327 + $0x170] sm:$0xff]
      %v375 = vld [vmem:[%s327 + $0x178] sm:$0xff]
      %376 = vmatprep.subr.mxu0 0.0
      %377 = vmatpush1.msra.mxu0 %v343
      %378 = vmatprep.subr.mxu0 0.0
      %379 = vmatpush1.msra.mxu0 %v342
      %380 = vmatprep.subr.mxu0 0.0
      %381 = vmatpush1.msra.mxu0 %v341
      %382 = vmatprep.subr.mxu0 0.0
      %383 = vmatpush1.msra.mxu0 %v340
      %384 = vmatprep.subr.mxu0 0.0
      %385 = vmatpush1.msra.mxu0 %v339
      %386 = vmatprep.subr.mxu0 0.0
      %387 = vmatpush1.msra.mxu0 %v338
      %388 = vmatprep.subr.mxu0 0.0
      %389 = vmatpush1.msra.mxu0 %v337
      %390 = vmatprep.subr.mxu0 0.0
      %391 = vmatpush1.msra.mxu0 %v336
      %392 = vmatprep.subr.mxu0 0.0
      %393 = vmatpush1.msra.mxu0 %v335
      %394 = vmatprep.subr.mxu0 0.0
      %395 = vmatpush1.msra.mxu0 %v334
      %396 = vmatprep.subr.mxu0 0.0
      %397 = vmatpush1.msra.mxu0 %v333
      %398 = vmatprep.subr.mxu0 0.0
      %399 = vmatpush1.msra.mxu0 %v332
      %400 = vmatprep.subr.mxu0 0.0
      %401 = vmatpush1.msra.mxu0 %v331
      %402 = vmatprep.subr.mxu0 0.0
      %403 = vmatpush1.msra.mxu0 %v330
      %404 = vmatprep.subr.mxu0 0.0
      %405 = vmatpush1.msra.mxu0 %v329
      %406 = vmatprep.subr.mxu0 0.0
      %407 = vmatpush1.msra.mxu0 %v328
      %408 = vmatprep.subr.mxu0 0.0
      %409 = vmatpush2.msra.mxu0 %v359
      %410 = vmatprep.subr.mxu0 0.0
      %411 = vmatpush2.msra.mxu0 %v358
      %412 = vmatprep.subr.mxu0 0.0
      %413 = vmatpush2.msra.mxu0 %v357
      %414 = vmatprep.subr.mxu0 0.0
      %415 = vmatpush2.msra.mxu0 %v356
      %416 = vmatprep.subr.mxu0 0.0
      %417 = vmatpush2.msra.mxu0 %v355
      %418 = vmatprep.subr.mxu0 0.0
      %419 = vmatpush2.msra.mxu0 %v354
      %420 = vmatprep.subr.mxu0 0.0
      %421 = vmatpush2.msra.mxu0 %v353
      %422 = vmatprep.subr.mxu0 0.0
      %423 = vmatpush2.msra.mxu0 %v352
      %424 = vmatprep.subr.mxu0 0.0
      %425 = vmatpush2.msra.mxu0 %v351
      %426 = vmatprep.subr.mxu0 0.0
      %427 = vmatpush2.msra.mxu0 %v350
      %428 = vmatprep.subr.mxu0 0.0
      %429 = vmatpush2.msra.mxu0 %v349
      %430 = vmatprep.subr.mxu0 0.0
      %431 = vmatpush2.msra.mxu0 %v348
      %432 = vmatprep.subr.mxu0 0.0
      %433 = vmatpush2.msra.mxu0 %v347
      %434 = vmatprep.subr.mxu0 0.0
      %435 = vmatpush2.msra.mxu0 %v346
      %436 = vmatprep.subr.mxu0 0.0
      %437 = vmatpush2.msra.mxu0 %v345
      %438 = vmatprep.subr.mxu0 0.0
      %439 = vmatpush2.msra.mxu0 %v344
      %440 = vmatprep.mubr.f32.mxu0 %v232
      %441 = vmatmul.mubr.f32.gmra.mxu0 %v231
      %v442 = vpop.f32.mrf.mxu0
      %v443 = vadd.f32 0.0, %v442
      %v444 = vpop.f32.mrf.mxu0
      %445 = vmatprep.mubr.f32.mxu0 %v235
      %446 = vmatmul.mubr.f32.gmra.mxu0 %v234
      %v447 = vpop.f32.mrf.mxu0
      %v448 = vadd.f32 0.0, %v447
      %v449 = vpop.f32.mrf.mxu0
      %450 = vmatprep.mubr.f32.mxu0 %v238
      %451 = vmatmul.mubr.f32.gmra.mxu0 %v237
      %v452 = vpop.f32.mrf.mxu0
      %v453 = vadd.f32 0.0, %v452
      %v454 = vpop.f32.mrf.mxu0
      %455 = vmatprep.mubr.f32.mxu0 %v241
      %456 = vmatmul.mubr.f32.gmra.mxu0 %v240
      %v457 = vpop.f32.mrf.mxu0
      %v458 = vadd.f32 0.0, %v457
      %v459 = vpop.f32.mrf.mxu0
      %460 = vmatprep.mubr.f32.mxu0 %v244
      %461 = vmatmul.mubr.f32.gmra.mxu0 %v243
      %v462 = vpop.f32.mrf.mxu0
      %v463 = vadd.f32 0.0, %v462
      %v464 = vpop.f32.mrf.mxu0
      %465 = vmatprep.mubr.f32.mxu0 %v247
      %466 = vmatmul.mubr.f32.gmra.mxu0 %v246
      %v467 = vpop.f32.mrf.mxu0
      %v468 = vadd.f32 0.0, %v467
      %v469 = vpop.f32.mrf.mxu0
      %470 = vmatprep.mubr.f32.mxu0 %v250
      %471 = vmatmul.mubr.f32.gmra.mxu0 %v249
      %v472 = vpop.f32.mrf.mxu0
      %v473 = vadd.f32 0.0, %v472
      %v474 = vpop.f32.mrf.mxu0
      %475 = vmatprep.mubr.f32.mxu0 %v253
      %476 = vmatmul.mubr.f32.gmra.mxu0 %v252
      %v477 = vpop.f32.mrf.mxu0
      %v478 = vadd.f32 0.0, %v477
      %v479 = vpop.f32.mrf.mxu0
      %480 = vmatprep.mubr.f32.mxu0 %v256
      %481 = vmatmul.mubr.f32.gmra.mxu0 %v255
      %v482 = vpop.f32.mrf.mxu0
      %v483 = vadd.f32 0.0, %v482
      %v484 = vpop.f32.mrf.mxu0
      %485 = vmatprep.mubr.f32.mxu0 %v259
      %486 = vmatmul.mubr.f32.gmra.mxu0 %v258
      %v487 = vpop.f32.mrf.mxu0
      %v488 = vadd.f32 0.0, %v487
      %v489 = vpop.f32.mrf.mxu0
      %490 = vmatprep.mubr.f32.mxu0 %v262
      %491 = vmatmul.mubr.f32.gmra.mxu0 %v261
      %v492 = vpop.f32.mrf.mxu0
      %v493 = vadd.f32 0.0, %v492
      %v494 = vpop.f32.mrf.mxu0
      %495 = vmatprep.mubr.f32.mxu0 %v265
      %496 = vmatmul.mubr.f32.gmra.mxu0 %v264
      %v497 = vpop.f32.mrf.mxu0
      %v498 = vadd.f32 0.0, %v497
      %v499 = vpop.f32.mrf.mxu0
      %500 = vmatprep.mubr.f32.mxu0 %v268
      %501 = vmatmul.mubr.f32.gmra.mxu0 %v267
      %v502 = vpop.f32.mrf.mxu0
      %v503 = vadd.f32 0.0, %v502
      %v504 = vpop.f32.mrf.mxu0
      %505 = vmatprep.mubr.f32.mxu0 %v271
      %506 = vmatmul.mubr.f32.gmra.mxu0 %v270
      %v507 = vpop.f32.mrf.mxu0
      %v508 = vadd.f32 0.0, %v507
      %v509 = vpop.f32.mrf.mxu0
      %510 = vmatprep.mubr.f32.mxu0 %v322
      %511 = vmatmul.mubr.f32.gmra.mxu0 %v321
      %v512 = vpop.f32.mrf.mxu0
      %v513 = vadd.f32 0.0, %v512
      %v514 = vpop.f32.mrf.mxu0
      %515 = vmatprep.mubr.f32.mxu0 %v325
      %516 = vmatmul.mubr.f32.gmra.mxu0 %v324
      %v517 = vpop.f32.mrf.mxu0
      %v518 = vadd.f32 0.0, %v517
      %v519 = vpop.f32.mrf.mxu0
      %520 = vdwg.mxu0
      %521 = vmatprep.subr.mxu0 0.0
      %522 = vmatpush1.msra.mxu0 %v375
      %523 = vmatprep.subr.mxu0 0.0
      %524 = vmatpush1.msra.mxu0 %v374
      %525 = vmatprep.subr.mxu0 0.0
      %526 = vmatpush1.msra.mxu0 %v373
      %527 = vmatprep.subr.mxu0 0.0
      %528 = vmatpush1.msra.mxu0 %v372
      %529 = vmatprep.subr.mxu0 0.0
      %530 = vmatpush1.msra.mxu0 %v371
      %531 = vmatprep.subr.mxu0 0.0
      %532 = vmatpush1.msra.mxu0 %v370
      %533 = vmatprep.subr.mxu0 0.0
      %534 = vmatpush1.msra.mxu0 %v369
      %535 = vmatprep.subr.mxu0 0.0
      %536 = vmatpush1.msra.mxu0 %v368
      %537 = vmatprep.subr.mxu0 0.0
      %538 = vmatpush1.msra.mxu0 %v367
      %539 = vmatprep.subr.mxu0 0.0
      %540 = vmatpush1.msra.mxu0 %v366
      %541 = vmatprep.subr.mxu0 0.0
      %542 = vmatpush1.msra.mxu0 %v365
      %543 = vmatprep.subr.mxu0 0.0
      %544 = vmatpush1.msra.mxu0 %v364
      %545 = vmatprep.subr.mxu0 0.0
      %546 = vmatpush1.msra.mxu0 %v363
      %547 = vmatprep.subr.mxu0 0.0
      %548 = vmatpush1.msra.mxu0 %v362
      %549 = vmatprep.subr.mxu0 0.0
      %550 = vmatpush1.msra.mxu0 %v361
      %551 = vmatprep.subr.mxu0 0.0
      %552 = vmatpush1.msra.mxu0 %v360
      %553 = vmatprep.subr.mxu0 0.0
      %554 = vmatpush2.msra.mxu0 0.0
      %555 = vmatprep.subr.mxu0 0.0
      %556 = vmatpush2.msra.mxu0 0.0
      %557 = vmatprep.subr.mxu0 0.0
      %558 = vmatpush2.msra.mxu0 0.0
      %559 = vmatprep.subr.mxu0 0.0
      %560 = vmatpush2.msra.mxu0 0.0
      %561 = vmatprep.subr.mxu0 0.0
      %562 = vmatpush2.msra.mxu0 0.0
      %563 = vmatprep.subr.mxu0 0.0
      %564 = vmatpush2.msra.mxu0 0.0
      %565 = vmatprep.subr.mxu0 0.0
      %566 = vmatpush2.msra.mxu0 0.0
      %567 = vmatprep.subr.mxu0 0.0
      %568 = vmatpush2.msra.mxu0 0.0
      %569 = vmatprep.subr.mxu0 0.0
      %570 = vmatpush2.msra.mxu0 0.0
      %571 = vmatprep.subr.mxu0 0.0
      %572 = vmatpush2.msra.mxu0 0.0
      %573 = vmatprep.subr.mxu0 0.0
      %574 = vmatpush2.msra.mxu0 0.0
      %575 = vmatprep.subr.mxu0 0.0
      %576 = vmatpush2.msra.mxu0 0.0
      %577 = vmatprep.subr.mxu0 0.0
      %578 = vmatpush2.msra.mxu0 0.0
      %579 = vmatprep.subr.mxu0 0.0
      %580 = vmatpush2.msra.mxu0 0.0
      %581 = vmatprep.subr.mxu0 0.0
      %582 = vmatpush2.msra.mxu0 0.0
      %583 = vmatprep.subr.mxu0 0.0
      %584 = vmatpush2.msra.mxu0 0.0
      %585 = vmatprep.mubr.f32.mxu0 0.0
      %586 = vmatmul.mubr.f32.gmra.mxu0 %v233
      %v587 = vpop.f32.mrf.mxu0
      %v588 = vadd.f32 %v443, %v587
      %v589 = vpop.f32.mrf.mxu0
      %590 = vmatprep.mubr.f32.mxu0 0.0
      %591 = vmatmul.mubr.f32.gmra.mxu0 %v236
      %v592 = vpop.f32.mrf.mxu0
      %v593 = vadd.f32 %v448, %v592
      %v594 = vpop.f32.mrf.mxu0
      %595 = vmatprep.mubr.f32.mxu0 0.0
      %596 = vmatmul.mubr.f32.gmra.mxu0 %v239
      %v597 = vpop.f32.mrf.mxu0
      %v598 = vadd.f32 %v453, %v597
      %v599 = vpop.f32.mrf.mxu0
      %600 = vmatprep.mubr.f32.mxu0 0.0
      %601 = vmatmul.mubr.f32.gmra.mxu0 %v242
      %v602 = vpop.f32.mrf.mxu0
      %v603 = vadd.f32 %v458, %v602
      %v604 = vpop.f32.mrf.mxu0
      %605 = vmatprep.mubr.f32.mxu0 0.0
      %606 = vmatmul.mubr.f32.gmra.mxu0 %v245
      %v607 = vpop.f32.mrf.mxu0
      %v608 = vadd.f32 %v463, %v607
      %v609 = vpop.f32.mrf.mxu0
      %610 = vmatprep.mubr.f32.mxu0 0.0
      %611 = vmatmul.mubr.f32.gmra.mxu0 %v248
      %v612 = vpop.f32.mrf.mxu0
      %v613 = vadd.f32 %v468, %v612
      %v614 = vpop.f32.mrf.mxu0
      %615 = vmatprep.mubr.f32.mxu0 0.0
      %616 = vmatmul.mubr.f32.gmra.mxu0 %v251
      %v617 = vpop.f32.mrf.mxu0
      %v618 = vadd.f32 %v473, %v617
      %v619 = vpop.f32.mrf.mxu0
      %620 = vmatprep.mubr.f32.mxu0 0.0
      %621 = vmatmul.mubr.f32.gmra.mxu0 %v254
      %v622 = vpop.f32.mrf.mxu0
      %v623 = vadd.f32 %v478, %v622
      %v624 = vpop.f32.mrf.mxu0
      %625 = vmatprep.mubr.f32.mxu0 0.0
      %626 = vmatmul.mubr.f32.gmra.mxu0 %v257
      %v627 = vpop.f32.mrf.mxu0
      %v628 = vadd.f32 %v483, %v627
      %v629 = vpop.f32.mrf.mxu0
      %630 = vmatprep.mubr.f32.mxu0 0.0
      %631 = vmatmul.mubr.f32.gmra.mxu0 %v260
      %v632 = vpop.f32.mrf.mxu0
      %v633 = vadd.f32 %v488, %v632
      %v634 = vpop.f32.mrf.mxu0
      %635 = vmatprep.mubr.f32.mxu0 0.0
      %636 = vmatmul.mubr.f32.gmra.mxu0 %v263
      %v637 = vpop.f32.mrf.mxu0
      %v638 = vadd.f32 %v493, %v637
      %v639 = vpop.f32.mrf.mxu0
      %640 = vmatprep.mubr.f32.mxu0 0.0
      %641 = vmatmul.mubr.f32.gmra.mxu0 %v266
      %v642 = vpop.f32.mrf.mxu0
      %v643 = vadd.f32 %v498, %v642
      %v644 = vpop.f32.mrf.mxu0
      %645 = vmatprep.mubr.f32.mxu0 0.0
      %646 = vmatmul.mubr.f32.gmra.mxu0 %v269
      %v647 = vpop.f32.mrf.mxu0
      %v648 = vadd.f32 %v503, %v647
      %v649 = vpop.f32.mrf.mxu0
      %650 = vmatprep.mubr.f32.mxu0 0.0
      %651 = vmatmul.mubr.f32.gmra.mxu0 %v272
      %v652 = vpop.f32.mrf.mxu0
      %v653 = vadd.f32 %v508, %v652
      %v654 = vpop.f32.mrf.mxu0
      %655 = vmatprep.mubr.f32.mxu0 0.0
      %656 = vmatmul.mubr.f32.gmra.mxu0 %v323
      %v657 = vpop.f32.mrf.mxu0
      %v658 = vadd.f32 %v513, %v657
      %v659 = vpop.f32.mrf.mxu0
      %660 = vmatprep.mubr.f32.mxu0 0.0
      %661 = vmatmul.mubr.f32.gmra.mxu0 %v326
      %v662 = vpop.f32.mrf.mxu0
      %v663 = vadd.f32 %v518, %v662
      %v664 = vpop.f32.mrf.mxu0
      %665 = vdwg.mxu0
      %666 = vmatprep.subr.mxu0 0.0
      %667 = vmatpush1.msra.mxu0 %v288
      %668 = vmatprep.subr.mxu0 0.0
      %669 = vmatpush1.msra.mxu0 %v287
      %670 = vmatprep.subr.mxu0 0.0
      %671 = vmatpush1.msra.mxu0 %v286
      %672 = vmatprep.subr.mxu0 0.0
      %673 = vmatpush1.msra.mxu0 %v285
      %674 = vmatprep.subr.mxu0 0.0
      %675 = vmatpush1.msra.mxu0 %v284
      %676 = vmatprep.subr.mxu0 0.0
      %677 = vmatpush1.msra.mxu0 %v283
      %678 = vmatprep.subr.mxu0 0.0
      %679 = vmatpush1.msra.mxu0 %v282
      %680 = vmatprep.subr.mxu0 0.0
      %681 = vmatpush1.msra.mxu0 %v281
      %682 = vmatprep.subr.mxu0 0.0
      %683 = vmatpush1.msra.mxu0 %v280
      %684 = vmatprep.subr.mxu0 0.0
      %685 = vmatpush1.msra.mxu0 %v279
      %686 = vmatprep.subr.mxu0 0.0
      %687 = vmatpush1.msra.mxu0 %v278
      %688 = vmatprep.subr.mxu0 0.0
      %689 = vmatpush1.msra.mxu0 %v277
      %690 = vmatprep.subr.mxu0 0.0
      %691 = vmatpush1.msra.mxu0 %v276
      %692 = vmatprep.subr.mxu0 0.0
      %693 = vmatpush1.msra.mxu0 %v275
      %694 = vmatprep.subr.mxu0 0.0
      %695 = vmatpush1.msra.mxu0 %v274
      %696 = vmatprep.subr.mxu0 0.0
      %697 = vmatpush1.msra.mxu0 %v273
      %698 = vmatprep.subr.mxu0 0.0
      %699 = vmatpush2.msra.mxu0 %v304
      %700 = vmatprep.subr.mxu0 0.0
      %701 = vmatpush2.msra.mxu0 %v303
      %702 = vmatprep.subr.mxu0 0.0
      %703 = vmatpush2.msra.mxu0 %v302
      %704 = vmatprep.subr.mxu0 0.0
      %705 = vmatpush2.msra.mxu0 %v301
      %706 = vmatprep.subr.mxu0 0.0
      %707 = vmatpush2.msra.mxu0 %v300
      %708 = vmatprep.subr.mxu0 0.0
      %709 = vmatpush2.msra.mxu0 %v299
      %710 = vmatprep.subr.mxu0 0.0
      %711 = vmatpush2.msra.mxu0 %v298
      %712 = vmatprep.subr.mxu0 0.0
      %713 = vmatpush2.msra.mxu0 %v297
      %714 = vmatprep.subr.mxu0 0.0
      %715 = vmatpush2.msra.mxu0 %v296
      %716 = vmatprep.subr.mxu0 0.0
      %717 = vmatpush2.msra.mxu0 %v295
      %718 = vmatprep.subr.mxu0 0.0
      %719 = vmatpush2.msra.mxu0 %v294
      %720 = vmatprep.subr.mxu0 0.0
      %721 = vmatpush2.msra.mxu0 %v293
      %722 = vmatprep.subr.mxu0 0.0
      %723 = vmatpush2.msra.mxu0 %v292
      %724 = vmatprep.subr.mxu0 0.0
      %725 = vmatpush2.msra.mxu0 %v291
      %726 = vmatprep.subr.mxu0 0.0
      %727 = vmatpush2.msra.mxu0 %v290
      %728 = vmatprep.subr.mxu0 0.0
      %729 = vmatpush2.msra.mxu0 %v289
      %730 = vmatprep.mubr.f32.mxu0 %v226
      %731 = vmatmul.mubr.f32.gmra.mxu0 %v225
      %v732 = vpop.f32.mrf.mxu0
      %v733 = vadd.f32 %v588, %v732
      %v734 = vpop.f32.mrf.mxu0
      %735 = vmatprep.mubr.f32.mxu0 %v229
      %736 = vmatmul.mubr.f32.gmra.mxu0 %v228
      %v737 = vpop.f32.mrf.mxu0
      %v738 = vadd.f32 %v593, %v737
      %v739 = vpop.f32.mrf.mxu0
      %740 = vmatprep.mubr.f32.mxu0 %v232
      %741 = vmatmul.mubr.f32.gmra.mxu0 %v231
      %v742 = vpop.f32.mrf.mxu0
      %v743 = vadd.f32 %v598, %v742
      %v744 = vpop.f32.mrf.mxu0
      %745 = vmatprep.mubr.f32.mxu0 %v235
      %746 = vmatmul.mubr.f32.gmra.mxu0 %v234
      %v747 = vpop.f32.mrf.mxu0
      %v748 = vadd.f32 %v603, %v747
      %v749 = vpop.f32.mrf.mxu0
      %750 = vmatprep.mubr.f32.mxu0 %v238
      %751 = vmatmul.mubr.f32.gmra.mxu0 %v237
      %v752 = vpop.f32.mrf.mxu0
      %v753 = vadd.f32 %v608, %v752
      %v754 = vpop.f32.mrf.mxu0
      %755 = vmatprep.mubr.f32.mxu0 %v241
      %756 = vmatmul.mubr.f32.gmra.mxu0 %v240
      %v757 = vpop.f32.mrf.mxu0
      %v758 = vadd.f32 %v613, %v757
      %v759 = vpop.f32.mrf.mxu0
      %760 = vmatprep.mubr.f32.mxu0 %v244
      %761 = vmatmul.mubr.f32.gmra.mxu0 %v243
      %v762 = vpop.f32.mrf.mxu0
      %v763 = vadd.f32 %v618, %v762
      %v764 = vpop.f32.mrf.mxu0
      %765 = vmatprep.mubr.f32.mxu0 %v247
      %766 = vmatmul.mubr.f32.gmra.mxu0 %v246
      %v767 = vpop.f32.mrf.mxu0
      %v768 = vadd.f32 %v623, %v767
      %v769 = vpop.f32.mrf.mxu0
      %770 = vmatprep.mubr.f32.mxu0 %v250
      %771 = vmatmul.mubr.f32.gmra.mxu0 %v249
      %v772 = vpop.f32.mrf.mxu0
      %v773 = vadd.f32 %v628, %v772
      %v774 = vpop.f32.mrf.mxu0
      %775 = vmatprep.mubr.f32.mxu0 %v253
      %776 = vmatmul.mubr.f32.gmra.mxu0 %v252
      %v777 = vpop.f32.mrf.mxu0
      %v778 = vadd.f32 %v633, %v777
      %v779 = vpop.f32.mrf.mxu0
      %780 = vmatprep.mubr.f32.mxu0 %v256
      %781 = vmatmul.mubr.f32.gmra.mxu0 %v255
      %v782 = vpop.f32.mrf.mxu0
      %v783 = vadd.f32 %v638, %v782
      %v784 = vpop.f32.mrf.mxu0
      %785 = vmatprep.mubr.f32.mxu0 %v259
      %786 = vmatmul.mubr.f32.gmra.mxu0 %v258
      %v787 = vpop.f32.mrf.mxu0
      %v788 = vadd.f32 %v643, %v787
      %v789 = vpop.f32.mrf.mxu0
      %790 = vmatprep.mubr.f32.mxu0 %v262
      %791 = vmatmul.mubr.f32.gmra.mxu0 %v261
      %v792 = vpop.f32.mrf.mxu0
      %v793 = vadd.f32 %v648, %v792
      %v794 = vpop.f32.mrf.mxu0
      %795 = vmatprep.mubr.f32.mxu0 %v265
      %796 = vmatmul.mubr.f32.gmra.mxu0 %v264
      %v797 = vpop.f32.mrf.mxu0
      %v798 = vadd.f32 %v653, %v797
      %v799 = vpop.f32.mrf.mxu0
      %800 = vmatprep.mubr.f32.mxu0 %v268
      %801 = vmatmul.mubr.f32.gmra.mxu0 %v267
      %v802 = vpop.f32.mrf.mxu0
      %v803 = vadd.f32 %v658, %v802
      %v804 = vpop.f32.mrf.mxu0
      %805 = vmatprep.mubr.f32.mxu0 %v271
      %806 = vmatmul.mubr.f32.gmra.mxu0 %v270
      %v807 = vpop.f32.mrf.mxu0
      %v808 = vadd.f32 %v663, %v807
      %v809 = vpop.f32.mrf.mxu0
      %810 = vdwg.mxu0
      %811 = vmatprep.subr.mxu0 0.0
      %812 = vmatpush1.msra.mxu0 %v320
      %813 = vmatprep.subr.mxu0 0.0
      %814 = vmatpush1.msra.mxu0 %v319
      %815 = vmatprep.subr.mxu0 0.0
      %816 = vmatpush1.msra.mxu0 %v318
      %817 = vmatprep.subr.mxu0 0.0
      %818 = vmatpush1.msra.mxu0 %v317
      %819 = vmatprep.subr.mxu0 0.0
      %820 = vmatpush1.msra.mxu0 %v316
      %821 = vmatprep.subr.mxu0 0.0
      %822 = vmatpush1.msra.mxu0 %v315
      %823 = vmatprep.subr.mxu0 0.0
      %824 = vmatpush1.msra.mxu0 %v314
      %825 = vmatprep.subr.mxu0 0.0
      %826 = vmatpush1.msra.mxu0 %v313
      %827 = vmatprep.subr.mxu0 0.0
      %828 = vmatpush1.msra.mxu0 %v312
      %829 = vmatprep.subr.mxu0 0.0
      %830 = vmatpush1.msra.mxu0 %v311
      %831 = vmatprep.subr.mxu0 0.0
      %832 = vmatpush1.msra.mxu0 %v310
      %833 = vmatprep.subr.mxu0 0.0
      %834 = vmatpush1.msra.mxu0 %v309
      %835 = vmatprep.subr.mxu0 0.0
      %836 = vmatpush1.msra.mxu0 %v308
      %837 = vmatprep.subr.mxu0 0.0
      %838 = vmatpush1.msra.mxu0 %v307
      %839 = vmatprep.subr.mxu0 0.0
      %840 = vmatpush1.msra.mxu0 %v306
      %841 = vmatprep.subr.mxu0 0.0
      %842 = vmatpush1.msra.mxu0 %v305
      %843 = vmatprep.subr.mxu0 0.0
      %844 = vmatpush2.msra.mxu0 0.0
      %845 = vmatprep.subr.mxu0 0.0
      %846 = vmatpush2.msra.mxu0 0.0
      %847 = vmatprep.subr.mxu0 0.0
      %848 = vmatpush2.msra.mxu0 0.0
      %849 = vmatprep.subr.mxu0 0.0
      %850 = vmatpush2.msra.mxu0 0.0
      %851 = vmatprep.subr.mxu0 0.0
      %852 = vmatpush2.msra.mxu0 0.0
      %853 = vmatprep.subr.mxu0 0.0
      %854 = vmatpush2.msra.mxu0 0.0
      %855 = vmatprep.subr.mxu0 0.0
      %856 = vmatpush2.msra.mxu0 0.0
      %857 = vmatprep.subr.mxu0 0.0
      %858 = vmatpush2.msra.mxu0 0.0
      %859 = vmatprep.subr.mxu0 0.0
      %860 = vmatpush2.msra.mxu0 0.0
      %861 = vmatprep.subr.mxu0 0.0
      %862 = vmatpush2.msra.mxu0 0.0
      %863 = vmatprep.subr.mxu0 0.0
      %864 = vmatpush2.msra.mxu0 0.0
      %865 = vmatprep.subr.mxu0 0.0
      %866 = vmatpush2.msra.mxu0 0.0
      %867 = vmatprep.subr.mxu0 0.0
      %868 = vmatpush2.msra.mxu0 0.0
      %869 = vmatprep.subr.mxu0 0.0
      %870 = vmatpush2.msra.mxu0 0.0
      %871 = vmatprep.subr.mxu0 0.0
      %872 = vmatpush2.msra.mxu0 0.0
      %873 = vmatprep.subr.mxu0 0.0
      %874 = vmatpush2.msra.mxu0 0.0
      %875 = vmatprep.mubr.f32.mxu0 0.0
      %876 = vmatmul.mubr.f32.gmra.mxu0 %v227
      %v877 = vpop.f32.mrf.mxu0
      %v878 = vadd.f32 %v733, %v877
      %v879 = vpop.f32.mrf.mxu0
      %880 = vmatprep.mubr.f32.mxu0 0.0
      %881 = vmatmul.mubr.f32.gmra.mxu0 %v230
      %v882 = vpop.f32.mrf.mxu0
      %v883 = vadd.f32 %v738, %v882
      %v884 = vpop.f32.mrf.mxu0
      %885 = vmatprep.mubr.f32.mxu0 0.0
      %886 = vmatmul.mubr.f32.gmra.mxu0 %v233
      %v887 = vpop.f32.mrf.mxu0
      %v888 = vadd.f32 %v743, %v887
      %v889 = vpop.f32.mrf.mxu0
      %890 = vmatprep.mubr.f32.mxu0 0.0
      %891 = vmatmul.mubr.f32.gmra.mxu0 %v236
      %v892 = vpop.f32.mrf.mxu0
      %v893 = vadd.f32 %v748, %v892
      %v894 = vpop.f32.mrf.mxu0
      %895 = vmatprep.mubr.f32.mxu0 0.0
      %896 = vmatmul.mubr.f32.gmra.mxu0 %v239
      %v897 = vpop.f32.mrf.mxu0
      %v898 = vadd.f32 %v753, %v897
      %v899 = vpop.f32.mrf.mxu0
      %900 = vmatprep.mubr.f32.mxu0 0.0
      %901 = vmatmul.mubr.f32.gmra.mxu0 %v242
      %v902 = vpop.f32.mrf.mxu0
      %v903 = vadd.f32 %v758, %v902
      %v904 = vpop.f32.mrf.mxu0
      %905 = vmatprep.mubr.f32.mxu0 0.0
      %906 = vmatmul.mubr.f32.gmra.mxu0 %v245
      %v907 = vpop.f32.mrf.mxu0
      %v908 = vadd.f32 %v763, %v907
      %v909 = vpop.f32.mrf.mxu0
      %910 = vmatprep.mubr.f32.mxu0 0.0
      %911 = vmatmul.mubr.f32.gmra.mxu0 %v248
      %v912 = vpop.f32.mrf.mxu0
      %v913 = vadd.f32 %v768, %v912
      %v914 = vpop.f32.mrf.mxu0
      %915 = vmatprep.mubr.f32.mxu0 0.0
      %916 = vmatmul.mubr.f32.gmra.mxu0 %v251
      %v917 = vpop.f32.mrf.mxu0
      %v918 = vadd.f32 %v773, %v917
      %v919 = vpop.f32.mrf.mxu0
      %920 = vmatprep.mubr.f32.mxu0 0.0
      %921 = vmatmul.mubr.f32.gmra.mxu0 %v254
      %v922 = vpop.f32.mrf.mxu0
      %v923 = vadd.f32 %v778, %v922
      %v924 = vpop.f32.mrf.mxu0
      %925 = vmatprep.mubr.f32.mxu0 0.0
      %926 = vmatmul.mubr.f32.gmra.mxu0 %v257
      %v927 = vpop.f32.mrf.mxu0
      %v928 = vadd.f32 %v783, %v927
      %v929 = vpop.f32.mrf.mxu0
      %930 = vmatprep.mubr.f32.mxu0 0.0
      %931 = vmatmul.mubr.f32.gmra.mxu0 %v260
      %v932 = vpop.f32.mrf.mxu0
      %v933 = vadd.f32 %v788, %v932
      %v934 = vpop.f32.mrf.mxu0
      %935 = vmatprep.mubr.f32.mxu0 0.0
      %936 = vmatmul.mubr.f32.gmra.mxu0 %v263
      %v937 = vpop.f32.mrf.mxu0
      %v938 = vadd.f32 %v793, %v937
      %v939 = vpop.f32.mrf.mxu0
      %940 = vmatprep.mubr.f32.mxu0 0.0
      %941 = vmatmul.mubr.f32.gmra.mxu0 %v266
      %v942 = vpop.f32.mrf.mxu0
      %v943 = vadd.f32 %v798, %v942
      %v944 = vpop.f32.mrf.mxu0
      %945 = vmatprep.mubr.f32.mxu0 0.0
      %946 = vmatmul.mubr.f32.gmra.mxu0 %v269
      %v947 = vpop.f32.mrf.mxu0
      %v948 = vadd.f32 %v803, %v947
      %v949 = vpop.f32.mrf.mxu0
      %950 = vmatprep.mubr.f32.mxu0 0.0
      %951 = vmatmul.mubr.f32.gmra.mxu0 %v272
      %v952 = vpop.f32.mrf.mxu0
      %v953 = vadd.f32 %v808, %v952
      %v954 = vpop.f32.mrf.mxu0
      %955 = vdwg.mxu0
      %v956 = vld [vmem:[%s210 + $0x60] sm:$0xff]
      %v957 = vld [vmem:[%s210 + $0x68] sm:$0xff]
      %v958 = vld [vmem:[%s210 + $0x70] sm:$0xff]
      %v959 = vld [vmem:[%s210 + $0x78] sm:$0xff]
      %v960 = vld [vmem:[%s210 + $0x80] sm:$0xff]
      %v961 = vld [vmem:[%s210 + $0x88] sm:$0xff]
      %v962 = vld [vmem:[%s210 + $0x90] sm:$0xff]
      %v963 = vld [vmem:[%s210 + $0x98] sm:$0xff]
      %v964 = vld [vmem:[%s210 + $0xa0] sm:$0xff]
      %v965 = vld [vmem:[%s210 + $0xa8] sm:$0xff]
      %v966 = vld [vmem:[%s210 + $0xb0] sm:$0xff]
      %v967 = vld [vmem:[%s210 + $0xb8] sm:$0xff]
      %v968 = vld [vmem:[%s210 + $0xc0] sm:$0xff]
      %v969 = vld [vmem:[%s210 + $0xc8] sm:$0xff]
      %v970 = vld [vmem:[%s210 + $0xd0] sm:$0xff]
      %v971 = vld [vmem:[%s210 + $0xd8] sm:$0xff]
      %v972 = vld [vmem:[%s210 + $0xe0] sm:$0xff]
      %v973 = vld [vmem:[%s210 + $0xe8] sm:$0xff]
      %v974 = vld [vmem:[%s210 + $0xf0] sm:$0xff]
      %v975 = vld [vmem:[%s210 + $0xf8] sm:$0xff]
      %v976 = vld [vmem:[%s210 + $0x100] sm:$0xff]
      %v977 = vld [vmem:[%s210 + $0x108] sm:$0xff]
      %v978 = vld [vmem:[%s210 + $0x110] sm:$0xff]
      %v979 = vld [vmem:[%s210 + $0x118] sm:$0xff]
      %v980 = vld [vmem:[%s210 + $0x120] sm:$0xff]
      %v981 = vld [vmem:[%s210 + $0x128] sm:$0xff]
      %v982 = vld [vmem:[%s210 + $0x130] sm:$0xff]
      %v983 = vld [vmem:[%s210 + $0x138] sm:$0xff]
      %v984 = vld [vmem:[%s210 + $0x140] sm:$0xff]
      %v985 = vld [vmem:[%s210 + $0x148] sm:$0xff]
      %v986 = vld [vmem:[%s210 + $0x150] sm:$0xff]
      %v987 = vld [vmem:[%s210 + $0x158] sm:$0xff]
      %v988 = vld [vmem:[%s210 + $0x160] sm:$0xff]
      %v989 = vld [vmem:[%s210 + $0x168] sm:$0xff]
      %v990 = vld [vmem:[%s210 + $0x170] sm:$0xff]
      %v991 = vld [vmem:[%s210 + $0x178] sm:$0xff]
      %v992 = vld [vmem:[%s210 + $0x180] sm:$0xff]
      %v993 = vld [vmem:[%s210 + $0x188] sm:$0xff]
      %v994 = vld [vmem:[%s210 + $0x190] sm:$0xff]
      %v995 = vld [vmem:[%s210 + $0x198] sm:$0xff]
      %v996 = vld [vmem:[%s210 + $0x1a0] sm:$0xff]
      %v997 = vld [vmem:[%s210 + $0x1a8] sm:$0xff]
      %v998 = vld [vmem:[%s210 + $0x1b0] sm:$0xff]
      %v999 = vld [vmem:[%s210 + $0x1b8] sm:$0xff]
      %v1000 = vld [vmem:[%s210 + $0x1c0] sm:$0xff]
      %v1001 = vld [vmem:[%s210 + $0x1c8] sm:$0xff]
      %v1002 = vld [vmem:[%s210 + $0x1d0] sm:$0xff]
      %v1003 = vld [vmem:[%s210 + $0x1d8] sm:$0xff]
      %s1004 = scalar_lea.vmem %s1, 768
      %v1005 = vld [vmem:[%s1004] sm:$0xff]
      %v1006 = vld [vmem:[%s1004 + $0x8] sm:$0xff]
      %v1007 = vld [vmem:[%s1004 + $0x10] sm:$0xff]
      %v1008 = vld [vmem:[%s1004 + $0x18] sm:$0xff]
      %v1009 = vld [vmem:[%s1004 + $0x20] sm:$0xff]
      %v1010 = vld [vmem:[%s1004 + $0x28] sm:$0xff]
      %v1011 = vld [vmem:[%s1004 + $0x30] sm:$0xff]
      %v1012 = vld [vmem:[%s1004 + $0x38] sm:$0xff]
      %v1013 = vld [vmem:[%s1004 + $0x40] sm:$0xff]
      %v1014 = vld [vmem:[%s1004 + $0x48] sm:$0xff]
      %v1015 = vld [vmem:[%s1004 + $0x50] sm:$0xff]
      %v1016 = vld [vmem:[%s1004 + $0x58] sm:$0xff]
      %v1017 = vld [vmem:[%s1004 + $0x60] sm:$0xff]
      %v1018 = vld [vmem:[%s1004 + $0x68] sm:$0xff]
      %v1019 = vld [vmem:[%s1004 + $0x70] sm:$0xff]
      %v1020 = vld [vmem:[%s1004 + $0x78] sm:$0xff]
      %v1021 = vld [vmem:[%s1004 + $0x80] sm:$0xff]
      %v1022 = vld [vmem:[%s1004 + $0x88] sm:$0xff]
      %v1023 = vld [vmem:[%s1004 + $0x90] sm:$0xff]
      %v1024 = vld [vmem:[%s1004 + $0x98] sm:$0xff]
      %v1025 = vld [vmem:[%s1004 + $0xa0] sm:$0xff]
      %v1026 = vld [vmem:[%s1004 + $0xa8] sm:$0xff]
      %v1027 = vld [vmem:[%s1004 + $0xb0] sm:$0xff]
      %v1028 = vld [vmem:[%s1004 + $0xb8] sm:$0xff]
      %v1029 = vld [vmem:[%s1004 + $0xc0] sm:$0xff]
      %v1030 = vld [vmem:[%s1004 + $0xc8] sm:$0xff]
      %v1031 = vld [vmem:[%s1004 + $0xd0] sm:$0xff]
      %v1032 = vld [vmem:[%s1004 + $0xd8] sm:$0xff]
      %v1033 = vld [vmem:[%s1004 + $0xe0] sm:$0xff]
      %v1034 = vld [vmem:[%s1004 + $0xe8] sm:$0xff]
      %v1035 = vld [vmem:[%s1004 + $0xf0] sm:$0xff]
      %v1036 = vld [vmem:[%s1004 + $0xf8] sm:$0xff]
      %v1037 = vld [vmem:[%s1004 + $0x100] sm:$0xff]
      %v1038 = vld [vmem:[%s1004 + $0x108] sm:$0xff]
      %v1039 = vld [vmem:[%s1004 + $0x110] sm:$0xff]
      %v1040 = vld [vmem:[%s1004 + $0x118] sm:$0xff]
      %v1041 = vld [vmem:[%s1004 + $0x120] sm:$0xff]
      %v1042 = vld [vmem:[%s1004 + $0x128] sm:$0xff]
      %v1043 = vld [vmem:[%s1004 + $0x130] sm:$0xff]
      %v1044 = vld [vmem:[%s1004 + $0x138] sm:$0xff]
      %v1045 = vld [vmem:[%s1004 + $0x140] sm:$0xff]
      %v1046 = vld [vmem:[%s1004 + $0x148] sm:$0xff]
      %v1047 = vld [vmem:[%s1004 + $0x150] sm:$0xff]
      %v1048 = vld [vmem:[%s1004 + $0x158] sm:$0xff]
      %v1049 = vld [vmem:[%s1004 + $0x160] sm:$0xff]
      %v1050 = vld [vmem:[%s1004 + $0x168] sm:$0xff]
      %v1051 = vld [vmem:[%s1004 + $0x170] sm:$0xff]
      %v1052 = vld [vmem:[%s1004 + $0x178] sm:$0xff]
      %1053 = vmatprep.subr.mxu0 0.0
      %1054 = vmatpush1.msra.mxu0 %v1020
      %1055 = vmatprep.subr.mxu0 0.0
      %1056 = vmatpush1.msra.mxu0 %v1019
      %1057 = vmatprep.subr.mxu0 0.0
      %1058 = vmatpush1.msra.mxu0 %v1018
      %1059 = vmatprep.subr.mxu0 0.0
      %1060 = vmatpush1.msra.mxu0 %v1017
      %1061 = vmatprep.subr.mxu0 0.0
      %1062 = vmatpush1.msra.mxu0 %v1016
      %1063 = vmatprep.subr.mxu0 0.0
      %1064 = vmatpush1.msra.mxu0 %v1015
      %1065 = vmatprep.subr.mxu0 0.0
      %1066 = vmatpush1.msra.mxu0 %v1014
      %1067 = vmatprep.subr.mxu0 0.0
      %1068 = vmatpush1.msra.mxu0 %v1013
      %1069 = vmatprep.subr.mxu0 0.0
      %1070 = vmatpush1.msra.mxu0 %v1012
      %1071 = vmatprep.subr.mxu0 0.0
      %1072 = vmatpush1.msra.mxu0 %v1011
      %1073 = vmatprep.subr.mxu0 0.0
      %1074 = vmatpush1.msra.mxu0 %v1010
      %1075 = vmatprep.subr.mxu0 0.0
      %1076 = vmatpush1.msra.mxu0 %v1009
      %1077 = vmatprep.subr.mxu0 0.0
      %1078 = vmatpush1.msra.mxu0 %v1008
      %1079 = vmatprep.subr.mxu0 0.0
      %1080 = vmatpush1.msra.mxu0 %v1007
      %1081 = vmatprep.subr.mxu0 0.0
      %1082 = vmatpush1.msra.mxu0 %v1006
      %1083 = vmatprep.subr.mxu0 0.0
      %1084 = vmatpush1.msra.mxu0 %v1005
      %1085 = vmatprep.subr.mxu0 0.0
      %1086 = vmatpush2.msra.mxu0 %v1036
      %1087 = vmatprep.subr.mxu0 0.0
      %1088 = vmatpush2.msra.mxu0 %v1035
      %1089 = vmatprep.subr.mxu0 0.0
      %1090 = vmatpush2.msra.mxu0 %v1034
      %1091 = vmatprep.subr.mxu0 0.0
      %1092 = vmatpush2.msra.mxu0 %v1033
      %1093 = vmatprep.subr.mxu0 0.0
      %1094 = vmatpush2.msra.mxu0 %v1032
      %1095 = vmatprep.subr.mxu0 0.0
      %1096 = vmatpush2.msra.mxu0 %v1031
      %1097 = vmatprep.subr.mxu0 0.0
      %1098 = vmatpush2.msra.mxu0 %v1030
      %1099 = vmatprep.subr.mxu0 0.0
      %1100 = vmatpush2.msra.mxu0 %v1029
      %1101 = vmatprep.subr.mxu0 0.0
      %1102 = vmatpush2.msra.mxu0 %v1028
      %1103 = vmatprep.subr.mxu0 0.0
      %1104 = vmatpush2.msra.mxu0 %v1027
      %1105 = vmatprep.subr.mxu0 0.0
      %1106 = vmatpush2.msra.mxu0 %v1026
      %1107 = vmatprep.subr.mxu0 0.0
      %1108 = vmatpush2.msra.mxu0 %v1025
      %1109 = vmatprep.subr.mxu0 0.0
      %1110 = vmatpush2.msra.mxu0 %v1024
      %1111 = vmatprep.subr.mxu0 0.0
      %1112 = vmatpush2.msra.mxu0 %v1023
      %1113 = vmatprep.subr.mxu0 0.0
      %1114 = vmatpush2.msra.mxu0 %v1022
      %1115 = vmatprep.subr.mxu0 0.0
      %1116 = vmatpush2.msra.mxu0 %v1021
      %1117 = vmatprep.mubr.f32.mxu0 %v957
      %1118 = vmatmul.mubr.f32.gmra.mxu0 %v956
      %v1119 = vpop.f32.mrf.mxu0
      %v1120 = vadd.f32 0.0, %v1119
      %v1121 = vpop.f32.mrf.mxu0
      %1122 = vmatprep.mubr.f32.mxu0 %v960
      %1123 = vmatmul.mubr.f32.gmra.mxu0 %v959
      %v1124 = vpop.f32.mrf.mxu0
      %v1125 = vadd.f32 0.0, %v1124
      %v1126 = vpop.f32.mrf.mxu0
      %1127 = vmatprep.mubr.f32.mxu0 %v963
      %1128 = vmatmul.mubr.f32.gmra.mxu0 %v962
      %v1129 = vpop.f32.mrf.mxu0
      %v1130 = vadd.f32 0.0, %v1129
      %v1131 = vpop.f32.mrf.mxu0
      %1132 = vmatprep.mubr.f32.mxu0 %v966
      %1133 = vmatmul.mubr.f32.gmra.mxu0 %v965
      %v1134 = vpop.f32.mrf.mxu0
      %v1135 = vadd.f32 0.0, %v1134
      %v1136 = vpop.f32.mrf.mxu0
      %1137 = vmatprep.mubr.f32.mxu0 %v969
      %1138 = vmatmul.mubr.f32.gmra.mxu0 %v968
      %v1139 = vpop.f32.mrf.mxu0
      %v1140 = vadd.f32 0.0, %v1139
      %v1141 = vpop.f32.mrf.mxu0
      %1142 = vmatprep.mubr.f32.mxu0 %v972
      %1143 = vmatmul.mubr.f32.gmra.mxu0 %v971
      %v1144 = vpop.f32.mrf.mxu0
      %v1145 = vadd.f32 0.0, %v1144
      %v1146 = vpop.f32.mrf.mxu0
      %1147 = vmatprep.mubr.f32.mxu0 %v975
      %1148 = vmatmul.mubr.f32.gmra.mxu0 %v974
      %v1149 = vpop.f32.mrf.mxu0
      %v1150 = vadd.f32 0.0, %v1149
      %v1151 = vpop.f32.mrf.mxu0
      %1152 = vmatprep.mubr.f32.mxu0 %v978
      %1153 = vmatmul.mubr.f32.gmra.mxu0 %v977
      %v1154 = vpop.f32.mrf.mxu0
      %v1155 = vadd.f32 0.0, %v1154
      %v1156 = vpop.f32.mrf.mxu0
      %1157 = vmatprep.mubr.f32.mxu0 %v981
      %1158 = vmatmul.mubr.f32.gmra.mxu0 %v980
      %v1159 = vpop.f32.mrf.mxu0
      %v1160 = vadd.f32 0.0, %v1159
      %v1161 = vpop.f32.mrf.mxu0
      %1162 = vmatprep.mubr.f32.mxu0 %v984
      %1163 = vmatmul.mubr.f32.gmra.mxu0 %v983
      %v1164 = vpop.f32.mrf.mxu0
      %v1165 = vadd.f32 0.0, %v1164
      %v1166 = vpop.f32.mrf.mxu0
      %1167 = vmatprep.mubr.f32.mxu0 %v987
      %1168 = vmatmul.mubr.f32.gmra.mxu0 %v986
      %v1169 = vpop.f32.mrf.mxu0
      %v1170 = vadd.f32 0.0, %v1169
      %v1171 = vpop.f32.mrf.mxu0
      %1172 = vmatprep.mubr.f32.mxu0 %v990
      %1173 = vmatmul.mubr.f32.gmra.mxu0 %v989
      %v1174 = vpop.f32.mrf.mxu0
      %v1175 = vadd.f32 0.0, %v1174
      %v1176 = vpop.f32.mrf.mxu0
      %1177 = vmatprep.mubr.f32.mxu0 %v993
      %1178 = vmatmul.mubr.f32.gmra.mxu0 %v992
      %v1179 = vpop.f32.mrf.mxu0
      %v1180 = vadd.f32 0.0, %v1179
      %v1181 = vpop.f32.mrf.mxu0
      %1182 = vmatprep.mubr.f32.mxu0 %v996
      %1183 = vmatmul.mubr.f32.gmra.mxu0 %v995
      %v1184 = vpop.f32.mrf.mxu0
      %v1185 = vadd.f32 0.0, %v1184
      %v1186 = vpop.f32.mrf.mxu0
      %1187 = vmatprep.mubr.f32.mxu0 %v999
      %1188 = vmatmul.mubr.f32.gmra.mxu0 %v998
      %v1189 = vpop.f32.mrf.mxu0
      %v1190 = vadd.f32 0.0, %v1189
      %v1191 = vpop.f32.mrf.mxu0
      %1192 = vmatprep.mubr.f32.mxu0 %v1002
      %1193 = vmatmul.mubr.f32.gmra.mxu0 %v1001
      %v1194 = vpop.f32.mrf.mxu0
      %v1195 = vadd.f32 0.0, %v1194
      %v1196 = vpop.f32.mrf.mxu0
      %1197 = vdwg.mxu0
      %1198 = vmatprep.subr.mxu0 0.0
      %1199 = vmatpush1.msra.mxu0 %v1052
      %1200 = vmatprep.subr.mxu0 0.0
      %1201 = vmatpush1.msra.mxu0 %v1051
      %1202 = vmatprep.subr.mxu0 0.0
      %1203 = vmatpush1.msra.mxu0 %v1050
      %1204 = vmatprep.subr.mxu0 0.0
      %1205 = vmatpush1.msra.mxu0 %v1049
      %1206 = vmatprep.subr.mxu0 0.0
      %1207 = vmatpush1.msra.mxu0 %v1048
      %1208 = vmatprep.subr.mxu0 0.0
      %1209 = vmatpush1.msra.mxu0 %v1047
      %1210 = vmatprep.subr.mxu0 0.0
      %1211 = vmatpush1.msra.mxu0 %v1046
      %1212 = vmatprep.subr.mxu0 0.0
      %1213 = vmatpush1.msra.mxu0 %v1045
      %1214 = vmatprep.subr.mxu0 0.0
      %1215 = vmatpush1.msra.mxu0 %v1044
      %1216 = vmatprep.subr.mxu0 0.0
      %1217 = vmatpush1.msra.mxu0 %v1043
      %1218 = vmatprep.subr.mxu0 0.0
      %1219 = vmatpush1.msra.mxu0 %v1042
      %1220 = vmatprep.subr.mxu0 0.0
      %1221 = vmatpush1.msra.mxu0 %v1041
      %1222 = vmatprep.subr.mxu0 0.0
      %1223 = vmatpush1.msra.mxu0 %v1040
      %1224 = vmatprep.subr.mxu0 0.0
      %1225 = vmatpush1.msra.mxu0 %v1039
      %1226 = vmatprep.subr.mxu0 0.0
      %1227 = vmatpush1.msra.mxu0 %v1038
      %1228 = vmatprep.subr.mxu0 0.0
      %1229 = vmatpush1.msra.mxu0 %v1037
      %1230 = vmatprep.subr.mxu0 0.0
      %1231 = vmatpush2.msra.mxu0 0.0
      %1232 = vmatprep.subr.mxu0 0.0
      %1233 = vmatpush2.msra.mxu0 0.0
      %1234 = vmatprep.subr.mxu0 0.0
      %1235 = vmatpush2.msra.mxu0 0.0
      %1236 = vmatprep.subr.mxu0 0.0
      %1237 = vmatpush2.msra.mxu0 0.0
      %1238 = vmatprep.subr.mxu0 0.0
      %1239 = vmatpush2.msra.mxu0 0.0
      %1240 = vmatprep.subr.mxu0 0.0
      %1241 = vmatpush2.msra.mxu0 0.0
      %1242 = vmatprep.subr.mxu0 0.0
      %1243 = vmatpush2.msra.mxu0 0.0
      %1244 = vmatprep.subr.mxu0 0.0
      %1245 = vmatpush2.msra.mxu0 0.0
      %1246 = vmatprep.subr.mxu0 0.0
      %1247 = vmatpush2.msra.mxu0 0.0
      %1248 = vmatprep.subr.mxu0 0.0
      %1249 = vmatpush2.msra.mxu0 0.0
      %1250 = vmatprep.subr.mxu0 0.0
      %1251 = vmatpush2.msra.mxu0 0.0
      %1252 = vmatprep.subr.mxu0 0.0
      %1253 = vmatpush2.msra.mxu0 0.0
      %1254 = vmatprep.subr.mxu0 0.0
      %1255 = vmatpush2.msra.mxu0 0.0
      %1256 = vmatprep.subr.mxu0 0.0
      %1257 = vmatpush2.msra.mxu0 0.0
      %1258 = vmatprep.subr.mxu0 0.0
      %1259 = vmatpush2.msra.mxu0 0.0
      %1260 = vmatprep.subr.mxu0 0.0
      %1261 = vmatpush2.msra.mxu0 0.0
      %1262 = vmatprep.mubr.f32.mxu0 0.0
      %1263 = vmatmul.mubr.f32.gmra.mxu0 %v958
      %v1264 = vpop.f32.mrf.mxu0
      %v1265 = vadd.f32 %v1120, %v1264
      %v1266 = vpop.f32.mrf.mxu0
      %1267 = vmatprep.mubr.f32.mxu0 0.0
      %1268 = vmatmul.mubr.f32.gmra.mxu0 %v961
      %v1269 = vpop.f32.mrf.mxu0
      %v1270 = vadd.f32 %v1125, %v1269
      %v1271 = vpop.f32.mrf.mxu0
      %1272 = vmatprep.mubr.f32.mxu0 0.0
      %1273 = vmatmul.mubr.f32.gmra.mxu0 %v964
      %v1274 = vpop.f32.mrf.mxu0
      %v1275 = vadd.f32 %v1130, %v1274
      %v1276 = vpop.f32.mrf.mxu0
      %1277 = vmatprep.mubr.f32.mxu0 0.0
      %1278 = vmatmul.mubr.f32.gmra.mxu0 %v967
      %v1279 = vpop.f32.mrf.mxu0
      %v1280 = vadd.f32 %v1135, %v1279
      %v1281 = vpop.f32.mrf.mxu0
      %1282 = vmatprep.mubr.f32.mxu0 0.0
      %1283 = vmatmul.mubr.f32.gmra.mxu0 %v970
      %v1284 = vpop.f32.mrf.mxu0
      %v1285 = vadd.f32 %v1140, %v1284
      %v1286 = vpop.f32.mrf.mxu0
      %1287 = vmatprep.mubr.f32.mxu0 0.0
      %1288 = vmatmul.mubr.f32.gmra.mxu0 %v973
      %v1289 = vpop.f32.mrf.mxu0
      %v1290 = vadd.f32 %v1145, %v1289
      %v1291 = vpop.f32.mrf.mxu0
      %1292 = vmatprep.mubr.f32.mxu0 0.0
      %1293 = vmatmul.mubr.f32.gmra.mxu0 %v976
      %v1294 = vpop.f32.mrf.mxu0
      %v1295 = vadd.f32 %v1150, %v1294
      %v1296 = vpop.f32.mrf.mxu0
      %1297 = vmatprep.mubr.f32.mxu0 0.0
      %1298 = vmatmul.mubr.f32.gmra.mxu0 %v979
      %v1299 = vpop.f32.mrf.mxu0
      %v1300 = vadd.f32 %v1155, %v1299
      %v1301 = vpop.f32.mrf.mxu0
      %1302 = vmatprep.mubr.f32.mxu0 0.0
      %1303 = vmatmul.mubr.f32.gmra.mxu0 %v982
      %v1304 = vpop.f32.mrf.mxu0
      %v1305 = vadd.f32 %v1160, %v1304
      %v1306 = vpop.f32.mrf.mxu0
      %1307 = vmatprep.mubr.f32.mxu0 0.0
      %1308 = vmatmul.mubr.f32.gmra.mxu0 %v985
      %v1309 = vpop.f32.mrf.mxu0
      %v1310 = vadd.f32 %v1165, %v1309
      %v1311 = vpop.f32.mrf.mxu0
      %1312 = vmatprep.mubr.f32.mxu0 0.0
      %1313 = vmatmul.mubr.f32.gmra.mxu0 %v988
      %v1314 = vpop.f32.mrf.mxu0
      %v1315 = vadd.f32 %v1170, %v1314
      %v1316 = vpop.f32.mrf.mxu0
      %1317 = vmatprep.mubr.f32.mxu0 0.0
      %1318 = vmatmul.mubr.f32.gmra.mxu0 %v991
      %v1319 = vpop.f32.mrf.mxu0
      %v1320 = vadd.f32 %v1175, %v1319
      %v1321 = vpop.f32.mrf.mxu0
      %1322 = vmatprep.mubr.f32.mxu0 0.0
      %1323 = vmatmul.mubr.f32.gmra.mxu0 %v994
      %v1324 = vpop.f32.mrf.mxu0
      %v1325 = vadd.f32 %v1180, %v1324
      %v1326 = vpop.f32.mrf.mxu0
      %1327 = vmatprep.mubr.f32.mxu0 0.0
      %1328 = vmatmul.mubr.f32.gmra.mxu0 %v997
      %v1329 = vpop.f32.mrf.mxu0
      %v1330 = vadd.f32 %v1185, %v1329
      %v1331 = vpop.f32.mrf.mxu0
      %1332 = vmatprep.mubr.f32.mxu0 0.0
      %1333 = vmatmul.mubr.f32.gmra.mxu0 %v1000
      %v1334 = vpop.f32.mrf.mxu0
      %v1335 = vadd.f32 %v1190, %v1334
      %v1336 = vpop.f32.mrf.mxu0
      %1337 = vmatprep.mubr.f32.mxu0 0.0
      %1338 = vmatmul.mubr.f32.gmra.mxu0 %v1003
      %v1339 = vpop.f32.mrf.mxu0
      %v1340 = vadd.f32 %v1195, %v1339
      %v1341 = vpop.f32.mrf.mxu0
      %1342 = vdwg.mxu0
      %v1343 = vadd.f32 %v878, %v1265
      %v1344 = vadd.f32 %v883, %v1270
      %v1345 = vadd.f32 %v888, %v1275
      %v1346 = vadd.f32 %v893, %v1280
      %v1347 = vadd.f32 %v898, %v1285
      %v1348 = vadd.f32 %v903, %v1290
      %v1349 = vadd.f32 %v908, %v1295
      %v1350 = vadd.f32 %v913, %v1300
      %v1351 = vadd.f32 %v918, %v1305
      %v1352 = vadd.f32 %v923, %v1310
      %v1353 = vadd.f32 %v928, %v1315
      %v1354 = vadd.f32 %v933, %v1320
      %v1355 = vadd.f32 %v938, %v1325
      %v1356 = vadd.f32 %v943, %v1330
      %v1357 = vadd.f32 %v948, %v1335
      %v1358 = vadd.f32 %v953, %v1340
      %v1359 = vld [vmem:[%s214] sm:$0x1]
      %v1360 = vlaneseq
      %v1361 = vshrl.u32 %v1360, 7
      %v1362 = vsub.s32 0, %v1361
      %v1363 = vrot.slane %v1359, %v1362
      %v1364 = vmul.f32 %v1343, %v1363
      %v1365 = vmul.f32 %v1344, %v1363
      %v1366 = vmul.f32 %v1345, %v1363
      %v1367 = vmul.f32 %v1346, %v1363
      %v1368 = vmul.f32 %v1347, %v1363
      %v1369 = vmul.f32 %v1348, %v1363
      %v1370 = vmul.f32 %v1349, %v1363
      %v1371 = vmul.f32 %v1350, %v1363
      %v1372 = vmul.f32 %v1351, %v1363
      %v1373 = vmul.f32 %v1352, %v1363
      %v1374 = vmul.f32 %v1353, %v1363
      %v1375 = vmul.f32 %v1354, %v1363
      %v1376 = vmul.f32 %v1355, %v1363
      %v1377 = vmul.f32 %v1356, %v1363
      %v1378 = vmul.f32 %v1357, %v1363
      %v1379 = vmul.f32 %v1358, %v1363
      %v1380 = vld [vmem:[%s214 + $0x1] sm:$0x1]
      %v1381 = vlaneseq
      %v1382 = vshrl.u32 %v1381, 7
      %v1383 = vsub.s32 0, %v1382
      %v1384 = vrot.slane %v1380, %v1383
      %v1385 = vadd.f32 %v1364, %v1384
      %v1386 = vadd.f32 %v1365, %v1384
      %v1387 = vadd.f32 %v1366, %v1384
      %v1388 = vadd.f32 %v1367, %v1384
      %v1389 = vadd.f32 %v1368, %v1384
      %v1390 = vadd.f32 %v1369, %v1384
      %v1391 = vadd.f32 %v1370, %v1384
      %v1392 = vadd.f32 %v1371, %v1384
      %v1393 = vadd.f32 %v1372, %v1384
      %v1394 = vadd.f32 %v1373, %v1384
      %v1395 = vadd.f32 %v1374, %v1384
      %v1396 = vadd.f32 %v1375, %v1384
      %v1397 = vadd.f32 %v1376, %v1384
      %v1398 = vadd.f32 %v1377, %v1384
      %v1399 = vadd.f32 %v1378, %v1384
      %v1400 = vadd.f32 %v1379, %v1384
      %1401 = vst [vmem:[%s223] sm:$0xff] %v1385
      %1402 = vst [vmem:[%s223 + $0x8] sm:$0xff] %v1386
      %1403 = vst [vmem:[%s223 + $0x10] sm:$0xff] %v1387
      %1404 = vst [vmem:[%s223 + $0x18] sm:$0xff] %v1388
      %1405 = vst [vmem:[%s223 + $0x20] sm:$0xff] %v1389
      %1406 = vst [vmem:[%s223 + $0x28] sm:$0xff] %v1390
      %1407 = vst [vmem:[%s223 + $0x30] sm:$0xff] %v1391
      %1408 = vst [vmem:[%s223 + $0x38] sm:$0xff] %v1392
      %1409 = vst [vmem:[%s223 + $0x40] sm:$0xff] %v1393
      %1410 = vst [vmem:[%s223 + $0x48] sm:$0xff] %v1394
      %1411 = vst [vmem:[%s223 + $0x50] sm:$0xff] %v1395
      %1412 = vst [vmem:[%s223 + $0x58] sm:$0xff] %v1396
      %1413 = vst [vmem:[%s223 + $0x60] sm:$0xff] %v1397
      %1414 = vst [vmem:[%s223 + $0x68] sm:$0xff] %v1398
      %1415 = vst [vmem:[%s223 + $0x70] sm:$0xff] %v1399
      %1416 = vst [vmem:[%s223 + $0x78] sm:$0xff] %v1400
      %s1417 = smul.u32 16, %s19
      %p1418 = scmp.lt.s32.totalorder %s18, 1
      %s1419 = scalar_select %p1418, %s18, 1
      %p1420 = scmp.lt.s32.totalorder %s1417, 31
      %s1421 = scalar_select %p1420, %s1417, 31
      %s1422 = smul.addr %s1419, 32
      %s1423 = sadd.s32 %s1421, %s1422
      %s1424 = smul.addr %s1423, 8
      %s1425 = scalar_lea.vmem %s3, %s1424
      // Predicated region
      $region33: #{styled_f_conv_block.3} parent=31 // pred_check
        %p1426 = pneg %p121
      $region34: #{styled_f_conv_block.3} parent=31 // pred_check_branch
        %1428 = sbr.rel (%p1426) target = $region36
      $region35: #{styled_f_conv_block.3} parent=31 // pred_region
        %s1429 = smul.u32 16, %s19
      $region36: #{styled_f_conv_block.3} parent=31 // pred_fallthru
        _
    $region32: #{styled_f_conv_block.3} parent=5 // pred_fallthru
      _
    %p1430 = scmp.le.s32.totalorder 2, %s9
    // Predicated region
    $region37: #{styled_f_conv_block.3} parent=5 // pred_check
      %p1431 = pneg %p1430
    $region38: #{styled_f_conv_block.3} parent=5 // pred_check_branch
      %1433 = sbr.rel (%p1431) target = $region40
    $region39: #{styled_f_conv_block.3} parent=5 // pred_region
      %s1434 = ssub.s32 %s9, 2
      // Predicated region
      $region41: #{styled_f_conv_block.3} parent=39 // pred_check
        %p1435 = pneg %p127
      $region42: #{styled_f_conv_block.3} parent=39 // pred_check_branch
        %1437 = sbr.rel (%p1435) target = $region44
      $region43: #{styled_f_conv_block.3} parent=39 // pred_region
        %s1438 = smul.u32 16, %s21
        %p1439 = scmp.lt.s32.totalorder %s20, 1
        %s1440 = scalar_select %p1439, %s20, 1
        %p1441 = scmp.lt.s32.totalorder %s1438, 31
        %s1442 = scalar_select %p1441, %s1438, 31
        %s1443 = smul.addr %s1440, 32
        %s1444 = sadd.s32 %s1442, %s1443
        %s1445 = smul.addr %s1444, 8
        %s1446 = scalar_lea.vmem %s3, %s1445
      $region44: #{styled_f_conv_block.3} parent=39 // pred_fallthru
        _
    $region40: #{styled_f_conv_block.3} parent=5 // pred_fallthru
      _
  $region6: #{styled_f_conv_block.3} parent=0 // loop_footer
    %s13 = sadd.s32 1, %s9
  $region7: #{styled_f_conv_block.3} parent=0 // loop_footer_branch
    %8 = sbr.rel target = $region3
  $region8: #{styled_f_conv_block.3} parent=0 // loop_exit
    _

</llo_original>
